<compile_context>
chip_gen: v6e
topology: v6e:2x2x1
jax: 0.10.0
libtpu: 0.0.40
codegen_flags: <defaults>
</compile_context>

<pallas_src>
import math

import jax
import jax.numpy as jnp
from jax.experimental import pallas as pl
from jax.experimental.pallas import tpu as pltpu


def _round_up(x, m):
    return ((x + m - 1) // m) * m


# ----------------------------------------------------------------------------- kernel
def stau_kernel(
    T_t_ref, S_t_ref, t_att_ref, s_att_ref, t_spatial_ref, s_spatial_ref,
    w_tn_ref, b_tn_ref, w_sn_ref, b_sn_ref,
    w_tg_ref, b_tg_ref, w_sg_ref, b_sg_ref,
    t_new_ref, s_new_ref,
):
    D = T_t_ref.shape[-1]                 # input_size == hidden_size
    tau = t_att_ref.shape[-1] // D        # attention stacks flattened as (b, tau*D)
    DP = w_tg_ref.shape[-1] // 3          # 128-aligned gate slab width (DP == D if D%128==0)
    inv_sqrt_d = 1.0 / math.sqrt(D)

    T_t = T_t_ref[...]                    # (b, D) f32
    S_t = S_t_ref[...]                    # (b, D) f32

    # ---- "next" projections: bf16 MXU operands, f32 accumulation --------------------
    t_next = (jnp.dot(T_t.astype(jnp.bfloat16), w_tn_ref[...],
                      preferred_element_type=jnp.float32) + b_tn_ref[...])   # (b, D)
    s_next = (jnp.dot(S_t.astype(jnp.bfloat16), w_sn_ref[...],
                      preferred_element_type=jnp.float32) + b_sn_ref[...])   # (b, D)

    # ---- attention scores over the tau segments (bf16 stream -> f32 math) -----------
    scores_s = []
    scores_t = []
    for i in range(tau):
        sa = s_att_ref[:, pl.ds(i * D, D)].astype(jnp.float32)        # (b, D)
        tsp = t_spatial_ref[:, pl.ds(i * D, D)].astype(jnp.float32)
        scores_s.append(jnp.sum(sa * s_next, axis=-1, keepdims=True) * inv_sqrt_d)
        scores_t.append(jnp.sum(tsp * t_next, axis=-1, keepdims=True) * inv_sqrt_d)

    def softmax_list(xs):                 # softmax over the tau stack (dim=0), VPU-only
        m = xs[0]
        for x in xs[1:]:
            m = jnp.maximum(m, x)
        es = [jnp.exp(x - m) for x in xs]
        tot = es[0]
        for e in es[1:]:
            tot = tot + e
        inv_tot = 1.0 / tot
        return [e * inv_tot for e in es]

    w_att = softmax_list(scores_s)        # tau x (b, 1)
    w_att_t = softmax_list(scores_t)

    # ---- trends: weighted sums over the tau segments ---------------------------------
    T_trend = w_att[0] * t_att_ref[:, pl.ds(0, D)].astype(jnp.float32)
    S_trend = w_att_t[0] * s_spatial_ref[:, pl.ds(0, D)].astype(jnp.float32)
    for i in range(1, tau):
        T_trend = T_trend + w_att[i] * t_att_ref[:, pl.ds(i * D, D)].astype(jnp.float32)
        S_trend = S_trend + w_att_t[i] * s_spatial_ref[:, pl.ds(i * D, D)].astype(jnp.float32)

    # ---- gated fusion: trend + gate * (x - trend)  (f32 elementwise) ------------------
    t_gate = jax.nn.sigmoid(t_next)
    s_gate = jax.nn.sigmoid(s_next)
    T_fusion = T_trend + t_gate * (T_t - T_trend)
    S_fusion = S_trend + s_gate * (S_t - S_trend)

    # ---- gate projections: each gate in its own DP-wide (128-aligned) slab ------------
    Tc = (jnp.dot(T_fusion.astype(jnp.bfloat16), w_tg_ref[...],
                  preferred_element_type=jnp.float32) + b_tg_ref[...])       # (b, 3*DP)
    Sc = (jnp.dot(S_fusion.astype(jnp.bfloat16), w_sg_ref[...],
                  preferred_element_type=jnp.float32) + b_sg_ref[...])       # (b, 3*DP)

    T_gate = jax.nn.sigmoid(Tc[:, :DP])
    S_gate = jax.nn.sigmoid(Sc[:, :DP])
    t_tt = Tc[:, DP:2 * DP]
    t_s = Tc[:, 2 * DP:]
    s_tt = Sc[:, DP:2 * DP]
    s_s = Sc[:, 2 * DP:]

    T_new = s_tt + T_gate * (t_tt - s_tt)
    S_new = t_s + S_gate * (s_s - t_s)

    t_new_ref[...] = T_new[:, :D]
    s_new_ref[...] = S_new[:, :D]


# --------------------------------------------------------------------- weight packing
def pack_params(p, D, DP):
    """bf16 weights (stored (D_in, D_out)), f32 biases; gate columns in DP slabs."""
    w_tn = jnp.asarray(p["w_t_next"], jnp.float32).astype(jnp.bfloat16)
    w_sn = jnp.asarray(p["w_s_next"], jnp.float32).astype(jnp.bfloat16)
    b_tn = jnp.asarray(p["b_t_next"], jnp.float32).reshape(1, D)
    b_sn = jnp.asarray(p["b_s_next"], jnp.float32).reshape(1, D)

    def slab(w, b):
        w = jnp.asarray(w, jnp.float32)
        b = jnp.asarray(b, jnp.float32).reshape(1, 3 * D)
        if DP == D:
            return w.astype(jnp.bfloat16), b
        wp = jnp.zeros((D, 3 * DP), jnp.float32)
        bp = jnp.zeros((1, 3 * DP), jnp.float32)
        for k in range(3):
            wp = wp.at[:, k * DP:k * DP + D].set(w[:, k * D:(k + 1) * D])
            bp = bp.at[:, k * DP:k * DP + D].set(b[:, k * D:(k + 1) * D])
        return wp.astype(jnp.bfloat16), bp

    w_tg, b_tg = slab(p["w_t"], p["b_t"])
    w_sg, b_sg = slab(p["w_s"], p["b_s"])
    return (w_tn, b_tn, w_sn, b_sn, w_tg, b_tg, w_sg, b_sg)


# ------------------------------------------------------------------ VMEM budget / tiling
def _vmem_budget():
    """Generation-aware but conservative (safe on v5e/v6e/v7x per-core VMEM)."""
    phys = 64 << 20                                   # v7x per-TensorCore VMEM
    try:
        cap = getattr(pltpu.get_tpu_info(), "vmem_capacity_bytes", None)
        if cap:
            phys = int(cap)
    except Exception:
        pass
    if phys >= (128 << 20):                           # v5e / v6e
        budget = 48 << 20
    else:
        budget = min(40 << 20, (phys * 5) // 8)
    limit = budget + (16 << 20)                       # scoped-limit guard with headroom
    return budget, limit


def _vmem_bytes(block_b, tau, D, DP):
    """Conservative estimate: double-buffered streams + resident weights + f32 temps."""
    Dl = _round_up(D, 128)
    LD = _round_up(tau * D, 128)
    bb16 = _round_up(max(block_b, 1), 16)             # bf16 sublane packing
    bb8 = _round_up(max(block_b, 1), 8)
    streamed = 2 * (4 * bb16 * LD * 2                 # bf16 attention stacks
                    + 2 * bb8 * Dl * 4                # f32 T_t, S_t
                    + 2 * bb8 * Dl * 4)               # f32 outputs
    weights = 2 * ((2 * D * Dl + 2 * D * 3 * DP) * 2  # bf16 weights (assume 2 buffers)
                   + (2 * 8 * Dl + 2 * 8 * 3 * DP) * 4)   # f32 biases (sublane-padded)
    interm = bb8 * 4 * (8 * Dl + 6 * DP)              # f32 kernel temporaries
    return streamed + weights + interm


def _pick_block_b(B, tau, D, DP, budget):
    if B <= 8:
        return B
    # keep >= 2 grid programs so both v7x TensorCores get work (also enables overlap)
    cap = min(B, max(8, _round_up((B + 1) // 2, 8)))
    per_row = (_vmem_bytes(160, tau, D, DP) - _vmem_bytes(32, tau, D, DP)) / 128.0
    base = _vmem_bytes(8, tau, D, DP) - 8 * per_row
    bb = int((budget - base) / max(per_row, 1.0))
    bb = max(8, min(cap, (bb // 8) * 8))
    while bb > 8 and _vmem_bytes(bb, tau, D, DP) > budget:
        bb -= 8
    return bb


# ---------------------------------------------------------------------------- wrapper
def _as_flat_bf16(x):
    """List/tuple of (B, D) arrays (preferred, like the torch module) or a stacked
    (tau, B, D) array -> lane-dense (B, tau*D) bf16."""
    if isinstance(x, (list, tuple)):
        return jnp.concatenate([jnp.asarray(a).astype(jnp.bfloat16) for a in x], axis=-1)
    x = jnp.asarray(x)
    tau, B, D = x.shape
    # TODO(synk): if callers hold the stacked (tau, B, D) layout, this transpose costs
    # one extra HBM pass; pass the per-step list (or a (B, tau*D) slab) to avoid it.
    return jnp.transpose(x, (1, 0, 2)).reshape(B, tau * D).astype(jnp.bfloat16)


def stau_cell(T_t, S_t, t_att, s_att, t_spatial, s_spatial, params):
    T_t = jnp.asarray(T_t, jnp.float32)
    S_t = jnp.asarray(S_t, jnp.float32)
    B, D = T_t.shape
    DP = _round_up(D, 128)

    t_att_f = _as_flat_bf16(t_att)
    s_att_f = _as_flat_bf16(s_att)
    t_spatial_f = _as_flat_bf16(t_spatial)
    s_spatial_f = _as_flat_bf16(s_spatial)
    tau = t_att_f.shape[-1] // D

    packed = pack_params(params, D, DP)

    budget, vmem_limit = _vmem_budget()
    block_b = _pick_block_b(B, tau, D, DP, budget)
    grid = (pl.cdiv(B, block_b),)

    cost = pl.CostEstimate(
        flops=int(2 * B * D * (2 * D + 6 * DP) + B * D * (8 * tau + 24)),
        transcendentals=int(2 * B * tau + 2 * B * D + 2 * B * DP),
        bytes_accessed=int(2 * 4 * B * tau * D              # bf16 attention stacks
                           + 4 * 4 * B * D                  # f32 state in + out
                           + 2 * (2 * D * D + 6 * D * DP)   # bf16 weights
                           + 4 * (2 * D + 6 * DP)),         # f32 biases
    )

    def call(single_buf_weights):
        wkw = dict(pipeline_mode=pl.Buffered(1)) if single_buf_weights else {}

        row_spec = pl.BlockSpec((block_b, D), lambda i: (i, 0))
        flat_spec = pl.BlockSpec((block_b, tau * D), lambda i: (i, 0))

        def wspec(a):   # resident weights/biases: constant block index, fetched once
            return pl.BlockSpec(a.shape, lambda i: (0, 0), **wkw)

        in_specs = [row_spec, row_spec, flat_spec, flat_spec, flat_spec, flat_spec]
        in_specs += [wspec(a) for a in packed]
        out_specs = [pl.BlockSpec((block_b, D), lambda i: (i, 0)),
                     pl.BlockSpec((block_b, D), lambda i: (i, 0))]

        return pl.pallas_call(
            stau_kernel,
            out_shape=(jax.ShapeDtypeStruct((B, D), jnp.float32),
                       jax.ShapeDtypeStruct((B, D), jnp.float32)),
            grid_spec=pltpu.PrefetchScalarGridSpec(
                num_scalar_prefetch=0,
                grid=grid,
                in_specs=in_specs,
                out_specs=out_specs,
            ),
            compiler_params=pltpu.CompilerParams(
                dimension_semantics=("parallel",),
                vmem_limit_bytes=int(vmem_limit),
            ),
            cost_estimate=cost,
        )(T_t, S_t, t_att_f, s_att_f, t_spatial_f, s_spatial_f, *packed)

    try:
        T_new, S_new = call(single_buf_weights=True)
    except Exception:
        # Fallback if this Pallas version rejects pl.Buffered(1) for inputs.
        T_new, S_new = call(single_buf_weights=False)
    return T_new, S_new


# ------------------------------------------------------------------- pure-JAX reference
def stau_ref(T_t, S_t, t_att, s_att, t_spatial, s_spatial, p,
             mxu_dtype=jnp.float32, stack_dtype=jnp.float32):
    d = p["w_t_next"].shape[1]

    def lin(x, w, b):
        return jnp.dot(x.astype(mxu_dtype), w.astype(mxu_dtype),
                       preferred_element_type=jnp.float32) + b

    def cast(x):
        return x.astype(stack_dtype).astype(jnp.float32)

    t_att, s_att = cast(t_att), cast(s_att)
    t_spatial, s_spatial = cast(t_spatial), cast(s_spatial)

    s_next = lin(S_t, p["w_s_next"], p["b_s_next"])
    t_next = lin(T_t, p["w_t_next"], p["b_t_next"])
    scores_s = (s_att * s_next[None]).sum(-1) / math.sqrt(d)
    scores_t = (t_spatial * t_next[None]).sum(-1) / math.sqrt(d)
    w_s = jax.nn.softmax(scores_s, axis=0)[..., None]
    w_t = jax.nn.softmax(scores_t, axis=0)[..., None]
    T_trend = (t_att * w_s).sum(0)
    S_trend = (s_spatial * w_t).sum(0)
    tg = jax.nn.sigmoid(t_next)
    sg = jax.nn.sigmoid(s_next)
    T_fusion = T_t * tg + (1 - tg) * T_trend
    S_fusion = S_t * sg + (1 - sg) * S_trend
    Tc = lin(T_fusion, p["w_t"], p["b_t"])
    Sc = lin(S_fusion, p["w_s"], p["b_s"])
    t_g, t_tt, t_s = Tc[:, :d], Tc[:, d:2 * d], Tc[:, 2 * d:]
    s_g, s_tt, s_s = Sc[:, :d], Sc[:, d:2 * d], Sc[:, 2 * d:]
    Tg, Sg = jax.nn.sigmoid(t_g), jax.nn.sigmoid(s_g)
    return Tg * t_tt + (1 - Tg) * s_tt, Sg * s_s + (1 - Sg) * t_s


# ------------------------------------------------------------------------------- main
def init_linear(key, d_in, d_out):
    # mirror torch.nn.Linear default init: U(-1/sqrt(d_in), 1/sqrt(d_in))
    kw, kb = jax.random.split(key)
    bound = 1.0 / math.sqrt(d_in)
    w = jax.random.uniform(kw, (d_in, d_out), jnp.float32, -bound, bound)  # stored transposed
    b = jax.random.uniform(kb, (1, d_out), jnp.float32, -bound, bound)
    return w, b


if __name__ == "__main__":
    B = 8            # batch (rows)
    D = 32           # input_size == hidden_size (required by the module's algebra)
    TAU = 4          # length of the t_att / s_att / t_spatial / s_spatial lists

    key = jax.random.PRNGKey(0)
    keys = jax.random.split(key, 10)

    params = {}
    params["w_t"], params["b_t"] = init_linear(keys[0], D, 3 * D)            # fl_t
    params["w_t_next"], params["b_t_next"] = init_linear(keys[1], D, D)      # fl_t_next
    params["w_s"], params["b_s"] = init_linear(keys[2], D, 3 * D)            # fl_s
    params["w_s_next"], params["b_s_next"] = init_linear(keys[3], D, D)      # fl_s_next

    T_t = jax.random.normal(keys[4], (B, D), jnp.float32)
    S_t = jax.random.normal(keys[5], (B, D), jnp.float32)
    t_att_s = jax.random.normal(keys[6], (TAU, B, D), jnp.float32)
    s_att_s = jax.random.normal(keys[7], (TAU, B, D), jnp.float32)
    t_spatial_s = jax.random.normal(keys[8], (TAU, B, D), jnp.float32)
    s_spatial_s = jax.random.normal(keys[9], (TAU, B, D), jnp.float32)

    # The module takes *lists* of (B, D) tensors; the wrapper stacks them lane-dense.
    t_att = [t_att_s[i] for i in range(TAU)]
    s_att = [s_att_s[i] for i in range(TAU)]
    t_spatial = [t_spatial_s[i] for i in range(TAU)]
    s_spatial = [s_spatial_s[i] for i in range(TAU)]

    T_new, S_new = jax.block_until_ready(
        stau_cell(T_t, S_t, t_att, s_att, t_spatial, s_spatial, params))
    assert T_new.shape == (B, D) and S_new.shape == (B, D)

    # Tight check: reference at the kernel's precision (bf16 stacks + bf16 MXU operands).
    T_rb, S_rb = stau_ref(T_t, S_t, t_att_s, s_att_s, t_spatial_s, s_spatial_s, params,
                          mxu_dtype=jnp.bfloat16, stack_dtype=jnp.bfloat16)
    assert jnp.allclose(T_new, T_rb, rtol=2e-2, atol=2e-2), "T_new mismatch (bf16 ref)"
    assert jnp.allclose(S_new, S_rb, rtol=2e-2, atol=2e-2), "S_new mismatch (bf16 ref)"

    # Semantic-fidelity check vs. full-f32 module math (loose: bf16 streaming / MXU).
    T_rf, S_rf = stau_ref(T_t, S_t, t_att_s, s_att_s, t_spatial_s, s_spatial_s, params)
    assert jnp.allclose(T_new, T_rf, rtol=1e-1, atol=1e-1), "T_new mismatch (f32 ref)"
    assert jnp.allclose(S_new, S_rf, rtol=1e-1, atol=1e-1), "S_new mismatch (f32 ref)"

    print("KERNEL_OK")
</pallas_src>

<mosaic_0001>
module attributes {stable_mosaic.version = 11 : i64} {
  func.func @stau_kernel(%arg0: i32, %arg1: memref<8x32xf32, #tpu.memory_space<vmem>>, %arg2: memref<8x32xf32, #tpu.memory_space<vmem>>, %arg3: memref<8x128xbf16, #tpu.memory_space<vmem>>, %arg4: memref<8x128xbf16, #tpu.memory_space<vmem>>, %arg5: memref<8x128xbf16, #tpu.memory_space<vmem>>, %arg6: memref<8x128xbf16, #tpu.memory_space<vmem>>, %arg7: memref<32x32xbf16, #tpu.memory_space<vmem>>, %arg8: memref<1x32xf32, #tpu.memory_space<vmem>>, %arg9: memref<32x32xbf16, #tpu.memory_space<vmem>>, %arg10: memref<1x32xf32, #tpu.memory_space<vmem>>, %arg11: memref<32x384xbf16, #tpu.memory_space<vmem>>, %arg12: memref<1x384xf32, #tpu.memory_space<vmem>>, %arg13: memref<32x384xbf16, #tpu.memory_space<vmem>>, %arg14: memref<1x384xf32, #tpu.memory_space<vmem>>, %arg15: memref<8x32xf32, #tpu.memory_space<vmem>>, %arg16: memref<8x32xf32, #tpu.memory_space<vmem>>) attributes {dimension_semantics = [#tpu.dimension_semantics<parallel>], iteration_bounds = array<i64: 1>, scalar_prefetch = 0 : i64, scratch_operands = 0 : i64, tpu.core_type = #tpu.core_type<tc>, window_params = [{transform_indices = @transform_0, window_bounds = array<i64: 8, 32>}, {transform_indices = @transform_1, window_bounds = array<i64: 8, 32>}, {transform_indices = @transform_2, window_bounds = array<i64: 8, 128>}, {transform_indices = @transform_3, window_bounds = array<i64: 8, 128>}, {transform_indices = @transform_4, window_bounds = array<i64: 8, 128>}, {transform_indices = @transform_5, window_bounds = array<i64: 8, 128>}, {pipeline_mode = #tpu.pipeline_mode<synchronous>, transform_indices = @transform_6, window_bounds = array<i64: 32, 32>}, {pipeline_mode = #tpu.pipeline_mode<synchronous>, transform_indices = @transform_7, window_bounds = array<i64: 1, 32>}, {pipeline_mode = #tpu.pipeline_mode<synchronous>, transform_indices = @transform_8, window_bounds = array<i64: 32, 32>}, {pipeline_mode = #tpu.pipeline_mode<synchronous>, transform_indices = @transform_9, window_bounds = array<i64: 1, 32>}, {pipeline_mode = #tpu.pipeline_mode<synchronous>, transform_indices = @transform_10, window_bounds = array<i64: 32, 384>}, {pipeline_mode = #tpu.pipeline_mode<synchronous>, transform_indices = @transform_11, window_bounds = array<i64: 1, 384>}, {pipeline_mode = #tpu.pipeline_mode<synchronous>, transform_indices = @transform_12, window_bounds = array<i64: 32, 384>}, {pipeline_mode = #tpu.pipeline_mode<synchronous>, transform_indices = @transform_13, window_bounds = array<i64: 1, 384>}, {transform_indices = @transform_14, window_bounds = array<i64: 8, 32>}, {transform_indices = @transform_15, window_bounds = array<i64: 8, 32>}]} {
    %c0 = arith.constant 0 : index
    %c0_0 = arith.constant 0 : index
    %0 = vector.load %arg1[%c0, %c0_0] : memref<8x32xf32, #tpu.memory_space<vmem>>, vector<8x32xf32>
    %c0_1 = arith.constant 0 : index
    %c0_2 = arith.constant 0 : index
    %1 = vector.load %arg2[%c0_1, %c0_2] : memref<8x32xf32, #tpu.memory_space<vmem>>, vector<8x32xf32>
    %2 = arith.truncf %0 : vector<8x32xf32> to vector<8x32xbf16>
    %c0_3 = arith.constant 0 : index
    %c0_4 = arith.constant 0 : index
    %3 = vector.load %arg7[%c0_3, %c0_4] : memref<32x32xbf16, #tpu.memory_space<vmem>>, vector<32x32xbf16>
    %cst = arith.constant dense<0.000000e+00> : vector<8x32xf32>
    %4 = tpu.matmul %2, %3, %cst {dimension_numbers = #tpu.dot_dimension_numbers<[1], [0], [0], [1], [0, 0, 1, 1], [], []>} : vector<8x32xbf16>, vector<32x32xbf16>, vector<8x32xf32> -> vector<8x32xf32>
    %c0_5 = arith.constant 0 : index
    %c0_6 = arith.constant 0 : index
    %5 = vector.load %arg8[%c0_5, %c0_6] : memref<1x32xf32, #tpu.memory_space<vmem>>, vector<1x32xf32>
    %6 = vector.broadcast %5 : vector<1x32xf32> to vector<8x32xf32>
    %7 = arith.addf %4, %6 : vector<8x32xf32>
    %8 = arith.truncf %1 : vector<8x32xf32> to vector<8x32xbf16>
    %c0_7 = arith.constant 0 : index
    %c0_8 = arith.constant 0 : index
    %9 = vector.load %arg9[%c0_7, %c0_8] : memref<32x32xbf16, #tpu.memory_space<vmem>>, vector<32x32xbf16>
    %cst_9 = arith.constant dense<0.000000e+00> : vector<8x32xf32>
    %10 = tpu.matmul %8, %9, %cst_9 {dimension_numbers = #tpu.dot_dimension_numbers<[1], [0], [0], [1], [0, 0, 1, 1], [], []>} : vector<8x32xbf16>, vector<32x32xbf16>, vector<8x32xf32> -> vector<8x32xf32>
    %c0_10 = arith.constant 0 : index
    %c0_11 = arith.constant 0 : index
    %11 = vector.load %arg10[%c0_10, %c0_11] : memref<1x32xf32, #tpu.memory_space<vmem>>, vector<1x32xf32>
    %12 = vector.broadcast %11 : vector<1x32xf32> to vector<8x32xf32>
    %13 = arith.addf %10, %12 : vector<8x32xf32>
    %c0_12 = arith.constant 0 : index
    %c0_13 = arith.constant 0 : index
    %14 = vector.load %arg4[%c0_12, %c0_13] : memref<8x128xbf16, #tpu.memory_space<vmem>>, vector<8x32xbf16>
    %15 = arith.extf %14 : vector<8x32xbf16> to vector<8x32xf32>
    %c0_14 = arith.constant 0 : index
    %c0_15 = arith.constant 0 : index
    %16 = vector.load %arg5[%c0_14, %c0_15] : memref<8x128xbf16, #tpu.memory_space<vmem>>, vector<8x32xbf16>
    %17 = arith.extf %16 : vector<8x32xbf16> to vector<8x32xf32>
    %18 = arith.mulf %15, %13 : vector<8x32xf32>
    %cst_16 = arith.constant dense<0.000000e+00> : vector<8xf32>
    %19 = vector.multi_reduction <add>, %18, %cst_16 [1] : vector<8x32xf32> to vector<8xf32>
    %20 = vector.shape_cast %19 : vector<8xf32> to vector<8x1xf32>
    %cst_17 = arith.constant 0.176776692 : f32
    %21 = vector.broadcast %cst_17 : f32 to vector<8x1xf32>
    %22 = arith.mulf %20, %21 : vector<8x1xf32>
    %23 = arith.mulf %17, %7 : vector<8x32xf32>
    %cst_18 = arith.constant dense<0.000000e+00> : vector<8xf32>
    %24 = vector.multi_reduction <add>, %23, %cst_18 [1] : vector<8x32xf32> to vector<8xf32>
    %25 = vector.shape_cast %24 : vector<8xf32> to vector<8x1xf32>
    %cst_19 = arith.constant 0.176776692 : f32
    %26 = vector.broadcast %cst_19 : f32 to vector<8x1xf32>
    %27 = arith.mulf %25, %26 : vector<8x1xf32>
    %c0_20 = arith.constant 0 : index
    %c32 = arith.constant 32 : index
    %28 = vector.load %arg4[%c0_20, %c32] : memref<8x128xbf16, #tpu.memory_space<vmem>>, vector<8x32xbf16>
    %29 = arith.extf %28 : vector<8x32xbf16> to vector<8x32xf32>
    %c0_21 = arith.constant 0 : index
    %c32_22 = arith.constant 32 : index
    %30 = vector.load %arg5[%c0_21, %c32_22] : memref<8x128xbf16, #tpu.memory_space<vmem>>, vector<8x32xbf16>
    %31 = arith.extf %30 : vector<8x32xbf16> to vector<8x32xf32>
    %32 = arith.mulf %29, %13 : vector<8x32xf32>
    %cst_23 = arith.constant dense<0.000000e+00> : vector<8xf32>
    %33 = vector.multi_reduction <add>, %32, %cst_23 [1] : vector<8x32xf32> to vector<8xf32>
    %34 = vector.shape_cast %33 : vector<8xf32> to vector<8x1xf32>
    %cst_24 = arith.constant 0.176776692 : f32
    %35 = vector.broadcast %cst_24 : f32 to vector<8x1xf32>
    %36 = arith.mulf %34, %35 : vector<8x1xf32>
    %37 = arith.mulf %31, %7 : vector<8x32xf32>
    %cst_25 = arith.constant dense<0.000000e+00> : vector<8xf32>
    %38 = vector.multi_reduction <add>, %37, %cst_25 [1] : vector<8x32xf32> to vector<8xf32>
    %39 = vector.shape_cast %38 : vector<8xf32> to vector<8x1xf32>
    %cst_26 = arith.constant 0.176776692 : f32
    %40 = vector.broadcast %cst_26 : f32 to vector<8x1xf32>
    %41 = arith.mulf %39, %40 : vector<8x1xf32>
    %c0_27 = arith.constant 0 : index
    %c64 = arith.constant 64 : index
    %42 = vector.load %arg4[%c0_27, %c64] : memref<8x128xbf16, #tpu.memory_space<vmem>>, vector<8x32xbf16>
    %43 = arith.extf %42 : vector<8x32xbf16> to vector<8x32xf32>
    %c0_28 = arith.constant 0 : index
    %c64_29 = arith.constant 64 : index
    %44 = vector.load %arg5[%c0_28, %c64_29] : memref<8x128xbf16, #tpu.memory_space<vmem>>, vector<8x32xbf16>
    %45 = arith.extf %44 : vector<8x32xbf16> to vector<8x32xf32>
    %46 = arith.mulf %43, %13 : vector<8x32xf32>
    %cst_30 = arith.constant dense<0.000000e+00> : vector<8xf32>
    %47 = vector.multi_reduction <add>, %46, %cst_30 [1] : vector<8x32xf32> to vector<8xf32>
    %48 = vector.shape_cast %47 : vector<8xf32> to vector<8x1xf32>
    %cst_31 = arith.constant 0.176776692 : f32
    %49 = vector.broadcast %cst_31 : f32 to vector<8x1xf32>
    %50 = arith.mulf %48, %49 : vector<8x1xf32>
    %51 = arith.mulf %45, %7 : vector<8x32xf32>
    %cst_32 = arith.constant dense<0.000000e+00> : vector<8xf32>
    %52 = vector.multi_reduction <add>, %51, %cst_32 [1] : vector<8x32xf32> to vector<8xf32>
    %53 = vector.shape_cast %52 : vector<8xf32> to vector<8x1xf32>
    %cst_33 = arith.constant 0.176776692 : f32
    %54 = vector.broadcast %cst_33 : f32 to vector<8x1xf32>
    %55 = arith.mulf %53, %54 : vector<8x1xf32>
    %c0_34 = arith.constant 0 : index
    %c96 = arith.constant 96 : index
    %56 = vector.load %arg4[%c0_34, %c96] : memref<8x128xbf16, #tpu.memory_space<vmem>>, vector<8x32xbf16>
    %57 = arith.extf %56 : vector<8x32xbf16> to vector<8x32xf32>
    %c0_35 = arith.constant 0 : index
    %c96_36 = arith.constant 96 : index
    %58 = vector.load %arg5[%c0_35, %c96_36] : memref<8x128xbf16, #tpu.memory_space<vmem>>, vector<8x32xbf16>
    %59 = arith.extf %58 : vector<8x32xbf16> to vector<8x32xf32>
    %60 = arith.mulf %57, %13 : vector<8x32xf32>
    %cst_37 = arith.constant dense<0.000000e+00> : vector<8xf32>
    %61 = vector.multi_reduction <add>, %60, %cst_37 [1] : vector<8x32xf32> to vector<8xf32>
    %62 = vector.shape_cast %61 : vector<8xf32> to vector<8x1xf32>
    %cst_38 = arith.constant 0.176776692 : f32
    %63 = vector.broadcast %cst_38 : f32 to vector<8x1xf32>
    %64 = arith.mulf %62, %63 : vector<8x1xf32>
    %65 = arith.mulf %59, %7 : vector<8x32xf32>
    %cst_39 = arith.constant dense<0.000000e+00> : vector<8xf32>
    %66 = vector.multi_reduction <add>, %65, %cst_39 [1] : vector<8x32xf32> to vector<8xf32>
    %67 = vector.shape_cast %66 : vector<8xf32> to vector<8x1xf32>
    %cst_40 = arith.constant 0.176776692 : f32
    %68 = vector.broadcast %cst_40 : f32 to vector<8x1xf32>
    %69 = arith.mulf %67, %68 : vector<8x1xf32>
    %70 = arith.maximumf %22, %36 : vector<8x1xf32>
    %71 = arith.maximumf %70, %50 : vector<8x1xf32>
    %72 = arith.maximumf %71, %64 : vector<8x1xf32>
    %73 = arith.subf %22, %72 : vector<8x1xf32>
    %74 = math.exp %73 : vector<8x1xf32>
    %75 = arith.subf %36, %72 : vector<8x1xf32>
    %76 = math.exp %75 : vector<8x1xf32>
    %77 = arith.subf %50, %72 : vector<8x1xf32>
    %78 = math.exp %77 : vector<8x1xf32>
    %79 = arith.subf %64, %72 : vector<8x1xf32>
    %80 = math.exp %79 : vector<8x1xf32>
    %81 = arith.addf %74, %76 : vector<8x1xf32>
    %82 = arith.addf %81, %78 : vector<8x1xf32>
    %83 = arith.addf %82, %80 : vector<8x1xf32>
    %cst_41 = arith.constant 1.000000e+00 : f32
    %84 = vector.broadcast %cst_41 : f32 to vector<8x1xf32>
    %85 = arith.divf %84, %83 : vector<8x1xf32>
    %86 = arith.mulf %74, %85 : vector<8x1xf32>
    %87 = arith.mulf %76, %85 : vector<8x1xf32>
    %88 = arith.mulf %78, %85 : vector<8x1xf32>
    %89 = arith.mulf %80, %85 : vector<8x1xf32>
    %90 = arith.maximumf %27, %41 : vector<8x1xf32>
    %91 = arith.maximumf %90, %55 : vector<8x1xf32>
    %92 = arith.maximumf %91, %69 : vector<8x1xf32>
    %93 = arith.subf %27, %92 : vector<8x1xf32>
    %94 = math.exp %93 : vector<8x1xf32>
    %95 = arith.subf %41, %92 : vector<8x1xf32>
    %96 = math.exp %95 : vector<8x1xf32>
    %97 = arith.subf %55, %92 : vector<8x1xf32>
    %98 = math.exp %97 : vector<8x1xf32>
    %99 = arith.subf %69, %92 : vector<8x1xf32>
    %100 = math.exp %99 : vector<8x1xf32>
    %101 = arith.addf %94, %96 : vector<8x1xf32>
    %102 = arith.addf %101, %98 : vector<8x1xf32>
    %103 = arith.addf %102, %100 : vector<8x1xf32>
    %cst_42 = arith.constant 1.000000e+00 : f32
    %104 = vector.broadcast %cst_42 : f32 to vector<8x1xf32>
    %105 = arith.divf %104, %103 : vector<8x1xf32>
    %106 = arith.mulf %94, %105 : vector<8x1xf32>
    %107 = arith.mulf %96, %105 : vector<8x1xf32>
    %108 = arith.mulf %98, %105 : vector<8x1xf32>
    %109 = arith.mulf %100, %105 : vector<8x1xf32>
    %c0_43 = arith.constant 0 : index
    %c0_44 = arith.constant 0 : index
    %110 = vector.load %arg3[%c0_43, %c0_44] : memref<8x128xbf16, #tpu.memory_space<vmem>>, vector<8x32xbf16>
    %111 = arith.extf %110 : vector<8x32xbf16> to vector<8x32xf32>
    %112 = vector.broadcast %86 : vector<8x1xf32> to vector<8x32xf32>
    %113 = arith.mulf %112, %111 : vector<8x32xf32>
    %c0_45 = arith.constant 0 : index
    %c0_46 = arith.constant 0 : index
    %114 = vector.load %arg6[%c0_45, %c0_46] : memref<8x128xbf16, #tpu.memory_space<vmem>>, vector<8x32xbf16>
    %115 = arith.extf %114 : vector<8x32xbf16> to vector<8x32xf32>
    %116 = vector.broadcast %106 : vector<8x1xf32> to vector<8x32xf32>
    %117 = arith.mulf %116, %115 : vector<8x32xf32>
    %c0_47 = arith.constant 0 : index
    %c32_48 = arith.constant 32 : index
    %118 = vector.load %arg3[%c0_47, %c32_48] : memref<8x128xbf16, #tpu.memory_space<vmem>>, vector<8x32xbf16>
    %119 = arith.extf %118 : vector<8x32xbf16> to vector<8x32xf32>
    %120 = vector.broadcast %87 : vector<8x1xf32> to vector<8x32xf32>
    %121 = arith.mulf %120, %119 : vector<8x32xf32>
    %122 = arith.addf %113, %121 : vector<8x32xf32>
    %c0_49 = arith.constant 0 : index
    %c32_50 = arith.constant 32 : index
    %123 = vector.load %arg6[%c0_49, %c32_50] : memref<8x128xbf16, #tpu.memory_space<vmem>>, vector<8x32xbf16>
    %124 = arith.extf %123 : vector<8x32xbf16> to vector<8x32xf32>
    %125 = vector.broadcast %107 : vector<8x1xf32> to vector<8x32xf32>
    %126 = arith.mulf %125, %124 : vector<8x32xf32>
    %127 = arith.addf %117, %126 : vector<8x32xf32>
    %c0_51 = arith.constant 0 : index
    %c64_52 = arith.constant 64 : index
    %128 = vector.load %arg3[%c0_51, %c64_52] : memref<8x128xbf16, #tpu.memory_space<vmem>>, vector<8x32xbf16>
    %129 = arith.extf %128 : vector<8x32xbf16> to vector<8x32xf32>
    %130 = vector.broadcast %88 : vector<8x1xf32> to vector<8x32xf32>
    %131 = arith.mulf %130, %129 : vector<8x32xf32>
    %132 = arith.addf %122, %131 : vector<8x32xf32>
    %c0_53 = arith.constant 0 : index
    %c64_54 = arith.constant 64 : index
    %133 = vector.load %arg6[%c0_53, %c64_54] : memref<8x128xbf16, #tpu.memory_space<vmem>>, vector<8x32xbf16>
    %134 = arith.extf %133 : vector<8x32xbf16> to vector<8x32xf32>
    %135 = vector.broadcast %108 : vector<8x1xf32> to vector<8x32xf32>
    %136 = arith.mulf %135, %134 : vector<8x32xf32>
    %137 = arith.addf %127, %136 : vector<8x32xf32>
    %c0_55 = arith.constant 0 : index
    %c96_56 = arith.constant 96 : index
    %138 = vector.load %arg3[%c0_55, %c96_56] : memref<8x128xbf16, #tpu.memory_space<vmem>>, vector<8x32xbf16>
    %139 = arith.extf %138 : vector<8x32xbf16> to vector<8x32xf32>
    %140 = vector.broadcast %89 : vector<8x1xf32> to vector<8x32xf32>
    %141 = arith.mulf %140, %139 : vector<8x32xf32>
    %142 = arith.addf %132, %141 : vector<8x32xf32>
    %c0_57 = arith.constant 0 : index
    %c96_58 = arith.constant 96 : index
    %143 = vector.load %arg6[%c0_57, %c96_58] : memref<8x128xbf16, #tpu.memory_space<vmem>>, vector<8x32xbf16>
    %144 = arith.extf %143 : vector<8x32xbf16> to vector<8x32xf32>
    %145 = vector.broadcast %109 : vector<8x1xf32> to vector<8x32xf32>
    %146 = arith.mulf %145, %144 : vector<8x32xf32>
    %147 = arith.addf %137, %146 : vector<8x32xf32>
    %148 = arith.negf %7 : vector<8x32xf32>
    %149 = math.exp %148 : vector<8x32xf32>
    %cst_59 = arith.constant 1.000000e+00 : f32
    %150 = vector.broadcast %cst_59 : f32 to vector<8x32xf32>
    %151 = arith.addf %150, %149 : vector<8x32xf32>
    %152 = arith.divf %150, %151 : vector<8x32xf32>
    %153 = arith.negf %13 : vector<8x32xf32>
    %154 = math.exp %153 : vector<8x32xf32>
    %cst_60 = arith.constant 1.000000e+00 : f32
    %155 = vector.broadcast %cst_60 : f32 to vector<8x32xf32>
    %156 = arith.addf %155, %154 : vector<8x32xf32>
    %157 = arith.divf %155, %156 : vector<8x32xf32>
    %158 = arith.subf %0, %142 : vector<8x32xf32>
    %159 = arith.mulf %152, %158 : vector<8x32xf32>
    %160 = arith.addf %142, %159 : vector<8x32xf32>
    %161 = arith.subf %1, %147 : vector<8x32xf32>
    %162 = arith.mulf %157, %161 : vector<8x32xf32>
    %163 = arith.addf %147, %162 : vector<8x32xf32>
    %164 = arith.truncf %160 : vector<8x32xf32> to vector<8x32xbf16>
    %c0_61 = arith.constant 0 : index
    %c0_62 = arith.constant 0 : index
    %165 = vector.load %arg11[%c0_61, %c0_62] : memref<32x384xbf16, #tpu.memory_space<vmem>>, vector<32x384xbf16>
    %cst_63 = arith.constant dense<0.000000e+00> : vector<8x384xf32>
    %166 = tpu.matmul %164, %165, %cst_63 {dimension_numbers = #tpu.dot_dimension_numbers<[1], [0], [0], [1], [0, 0, 1, 1], [], []>} : vector<8x32xbf16>, vector<32x384xbf16>, vector<8x384xf32> -> vector<8x384xf32>
    %c0_64 = arith.constant 0 : index
    %c0_65 = arith.constant 0 : index
    %167 = vector.load %arg12[%c0_64, %c0_65] : memref<1x384xf32, #tpu.memory_space<vmem>>, vector<1x384xf32>
    %168 = vector.broadcast %167 : vector<1x384xf32> to vector<8x384xf32>
    %169 = arith.addf %166, %168 : vector<8x384xf32>
    %170 = arith.truncf %163 : vector<8x32xf32> to vector<8x32xbf16>
    %c0_66 = arith.constant 0 : index
    %c0_67 = arith.constant 0 : index
    %171 = vector.load %arg13[%c0_66, %c0_67] : memref<32x384xbf16, #tpu.memory_space<vmem>>, vector<32x384xbf16>
    %cst_68 = arith.constant dense<0.000000e+00> : vector<8x384xf32>
    %172 = tpu.matmul %170, %171, %cst_68 {dimension_numbers = #tpu.dot_dimension_numbers<[1], [0], [0], [1], [0, 0, 1, 1], [], []>} : vector<8x32xbf16>, vector<32x384xbf16>, vector<8x384xf32> -> vector<8x384xf32>
    %c0_69 = arith.constant 0 : index
    %c0_70 = arith.constant 0 : index
    %173 = vector.load %arg14[%c0_69, %c0_70] : memref<1x384xf32, #tpu.memory_space<vmem>>, vector<1x384xf32>
    %174 = vector.broadcast %173 : vector<1x384xf32> to vector<8x384xf32>
    %175 = arith.addf %172, %174 : vector<8x384xf32>
    %176 = vector.extract_strided_slice %169 {offsets = [0, 0], sizes = [8, 128], strides = [1, 1]} : vector<8x384xf32> to vector<8x128xf32>
    %177 = arith.negf %176 : vector<8x128xf32>
    %178 = math.exp %177 : vector<8x128xf32>
    %cst_71 = arith.constant 1.000000e+00 : f32
    %179 = vector.broadcast %cst_71 : f32 to vector<8x128xf32>
    %180 = arith.addf %179, %178 : vector<8x128xf32>
    %181 = arith.divf %179, %180 : vector<8x128xf32>
    %182 = vector.extract_strided_slice %175 {offsets = [0, 0], sizes = [8, 128], strides = [1, 1]} : vector<8x384xf32> to vector<8x128xf32>
    %183 = arith.negf %182 : vector<8x128xf32>
    %184 = math.exp %183 : vector<8x128xf32>
    %cst_72 = arith.constant 1.000000e+00 : f32
    %185 = vector.broadcast %cst_72 : f32 to vector<8x128xf32>
    %186 = arith.addf %185, %184 : vector<8x128xf32>
    %187 = arith.divf %185, %186 : vector<8x128xf32>
    %188 = vector.extract_strided_slice %169 {offsets = [0, 128], sizes = [8, 128], strides = [1, 1]} : vector<8x384xf32> to vector<8x128xf32>
    %189 = vector.extract_strided_slice %169 {offsets = [0, 256], sizes = [8, 128], strides = [1, 1]} : vector<8x384xf32> to vector<8x128xf32>
    %190 = vector.extract_strided_slice %175 {offsets = [0, 128], sizes = [8, 128], strides = [1, 1]} : vector<8x384xf32> to vector<8x128xf32>
    %191 = vector.extract_strided_slice %175 {offsets = [0, 256], sizes = [8, 128], strides = [1, 1]} : vector<8x384xf32> to vector<8x128xf32>
    %192 = arith.subf %188, %190 : vector<8x128xf32>
    %193 = arith.mulf %181, %192 : vector<8x128xf32>
    %194 = arith.addf %190, %193 : vector<8x128xf32>
    %195 = arith.subf %191, %189 : vector<8x128xf32>
    %196 = arith.mulf %187, %195 : vector<8x128xf32>
    %197 = arith.addf %189, %196 : vector<8x128xf32>
    %198 = vector.extract_strided_slice %194 {offsets = [0, 0], sizes = [8, 32], strides = [1, 1]} : vector<8x128xf32> to vector<8x32xf32>
    %c0_73 = arith.constant 0 : index
    %c0_74 = arith.constant 0 : index
    %199 = vector.load %arg15[%c0_73, %c0_74] : memref<8x32xf32, #tpu.memory_space<vmem>>, vector<8x32xf32>
    tpu.vector_store %arg15[%c0_73, %c0_74], %198 {strides = array<i32>} : memref<8x32xf32, #tpu.memory_space<vmem>>, vector<8x32xf32>,
    %200 = vector.extract_strided_slice %197 {offsets = [0, 0], sizes = [8, 32], strides = [1, 1]} : vector<8x128xf32> to vector<8x32xf32>
    %c0_75 = arith.constant 0 : index
    %c0_76 = arith.constant 0 : index
    %201 = vector.load %arg16[%c0_75, %c0_76] : memref<8x32xf32, #tpu.memory_space<vmem>>, vector<8x32xf32>
    tpu.vector_store %arg16[%c0_75, %c0_76], %200 {strides = array<i32>} : memref<8x32xf32, #tpu.memory_space<vmem>>, vector<8x32xf32>,
    return
  }
  func.func @transform_0(%arg0: i32) -> (i32, i32) {
    %c0_i32 = arith.constant 0 : i32
    %c0_i32_0 = arith.constant 0 : i32
    return %arg0, %c0_i32 : i32, i32
  }
  func.func @transform_1(%arg0: i32) -> (i32, i32) {
    %c0_i32 = arith.constant 0 : i32
    %c0_i32_0 = arith.constant 0 : i32
    return %arg0, %c0_i32 : i32, i32
  }
  func.func @transform_2(%arg0: i32) -> (i32, i32) {
    %c0_i32 = arith.constant 0 : i32
    %c0_i32_0 = arith.constant 0 : i32
    return %arg0, %c0_i32 : i32, i32
  }
  func.func @transform_3(%arg0: i32) -> (i32, i32) {
    %c0_i32 = arith.constant 0 : i32
    %c0_i32_0 = arith.constant 0 : i32
    return %arg0, %c0_i32 : i32, i32
  }
  func.func @transform_4(%arg0: i32) -> (i32, i32) {
    %c0_i32 = arith.constant 0 : i32
    %c0_i32_0 = arith.constant 0 : i32
    return %arg0, %c0_i32 : i32, i32
  }
  func.func @transform_5(%arg0: i32) -> (i32, i32) {
    %c0_i32 = arith.constant 0 : i32
    %c0_i32_0 = arith.constant 0 : i32
    return %arg0, %c0_i32 : i32, i32
  }
  func.func @transform_6(%arg0: i32) -> (i32, i32) {
    %c0_i32 = arith.constant 0 : i32
    %c0_i32_0 = arith.constant 0 : i32
    %c0_i32_1 = arith.constant 0 : i32
    return %c0_i32, %c0_i32_0 : i32, i32
  }
  func.func @transform_7(%arg0: i32) -> (i32, i32) {
    %c0_i32 = arith.constant 0 : i32
    %c0_i32_0 = arith.constant 0 : i32
    %c0_i32_1 = arith.constant 0 : i32
    return %c0_i32, %c0_i32_0 : i32, i32
  }
  func.func @transform_8(%arg0: i32) -> (i32, i32) {
    %c0_i32 = arith.constant 0 : i32
    %c0_i32_0 = arith.constant 0 : i32
    %c0_i32_1 = arith.constant 0 : i32
    return %c0_i32, %c0_i32_0 : i32, i32
  }
  func.func @transform_9(%arg0: i32) -> (i32, i32) {
    %c0_i32 = arith.constant 0 : i32
    %c0_i32_0 = arith.constant 0 : i32
    %c0_i32_1 = arith.constant 0 : i32
    return %c0_i32, %c0_i32_0 : i32, i32
  }
  func.func @transform_10(%arg0: i32) -> (i32, i32) {
    %c0_i32 = arith.constant 0 : i32
    %c0_i32_0 = arith.constant 0 : i32
    %c0_i32_1 = arith.constant 0 : i32
    return %c0_i32, %c0_i32_0 : i32, i32
  }
  func.func @transform_11(%arg0: i32) -> (i32, i32) {
    %c0_i32 = arith.constant 0 : i32
    %c0_i32_0 = arith.constant 0 : i32
    %c0_i32_1 = arith.constant 0 : i32
    return %c0_i32, %c0_i32_0 : i32, i32
  }
  func.func @transform_12(%arg0: i32) -> (i32, i32) {
    %c0_i32 = arith.constant 0 : i32
    %c0_i32_0 = arith.constant 0 : i32
    %c0_i32_1 = arith.constant 0 : i32
    return %c0_i32, %c0_i32_0 : i32, i32
  }
  func.func @transform_13(%arg0: i32) -> (i32, i32) {
    %c0_i32 = arith.constant 0 : i32
    %c0_i32_0 = arith.constant 0 : i32
    %c0_i32_1 = arith.constant 0 : i32
    return %c0_i32, %c0_i32_0 : i32, i32
  }
  func.func @transform_14(%arg0: i32) -> (i32, i32) {
    %c0_i32 = arith.constant 0 : i32
    %c0_i32_0 = arith.constant 0 : i32
    return %arg0, %c0_i32 : i32, i32
  }
  func.func @transform_15(%arg0: i32) -> (i32, i32) {
    %c0_i32 = arith.constant 0 : i32
    %c0_i32_0 = arith.constant 0 : i32
    return %arg0, %c0_i32 : i32, i32
  }
}

module attributes {stable_mosaic.version = 11 : i64} {
  func.func @stau_kernel(%arg0: i32, %arg1: memref<8x32xf32, #tpu.memory_space<vmem>>, %arg2: memref<8x32xf32, #tpu.memory_space<vmem>>, %arg3: memref<8x128xbf16, #tpu.memory_space<vmem>>, %arg4: memref<8x128xbf16, #tpu.memory_space<vmem>>, %arg5: memref<8x128xbf16, #tpu.memory_space<vmem>>, %arg6: memref<8x128xbf16, #tpu.memory_space<vmem>>, %arg7: memref<32x32xbf16, #tpu.memory_space<vmem>>, %arg8: memref<1x32xf32, #tpu.memory_space<vmem>>, %arg9: memref<32x32xbf16, #tpu.memory_space<vmem>>, %arg10: memref<1x32xf32, #tpu.memory_space<vmem>>, %arg11: memref<32x384xbf16, #tpu.memory_space<vmem>>, %arg12: memref<1x384xf32, #tpu.memory_space<vmem>>, %arg13: memref<32x384xbf16, #tpu.memory_space<vmem>>, %arg14: memref<1x384xf32, #tpu.memory_space<vmem>>, %arg15: memref<8x32xf32, #tpu.memory_space<vmem>>, %arg16: memref<8x32xf32, #tpu.memory_space<vmem>>) attributes {dimension_semantics = [#tpu.dimension_semantics<parallel>], iteration_bounds = array<i64: 1>, scalar_prefetch = 0 : i64, scratch_operands = 0 : i64, tpu.core_type = #tpu.core_type<tc>, window_params = [{transform_indices = @transform_0, window_bounds = array<i64: 8, 32>}, {transform_indices = @transform_1, window_bounds = array<i64: 8, 32>}, {transform_indices = @transform_2, window_bounds = array<i64: 8, 128>}, {transform_indices = @transform_3, window_bounds = array<i64: 8, 128>}, {transform_indices = @transform_4, window_bounds = array<i64: 8, 128>}, {transform_indices = @transform_5, window_bounds = array<i64: 8, 128>}, {pipeline_mode = #tpu.pipeline_mode<synchronous>, transform_indices = @transform_6, window_bounds = array<i64: 32, 32>}, {pipeline_mode = #tpu.pipeline_mode<synchronous>, transform_indices = @transform_7, window_bounds = array<i64: 1, 32>}, {pipeline_mode = #tpu.pipeline_mode<synchronous>, transform_indices = @transform_8, window_bounds = array<i64: 32, 32>}, {pipeline_mode = #tpu.pipeline_mode<synchronous>, transform_indices = @transform_9, window_bounds = array<i64: 1, 32>}, {pipeline_mode = #tpu.pipeline_mode<synchronous>, transform_indices = @transform_10, window_bounds = array<i64: 32, 384>}, {pipeline_mode = #tpu.pipeline_mode<synchronous>, transform_indices = @transform_11, window_bounds = array<i64: 1, 384>}, {pipeline_mode = #tpu.pipeline_mode<synchronous>, transform_indices = @transform_12, window_bounds = array<i64: 32, 384>}, {pipeline_mode = #tpu.pipeline_mode<synchronous>, transform_indices = @transform_13, window_bounds = array<i64: 1, 384>}, {transform_indices = @transform_14, window_bounds = array<i64: 8, 32>}, {transform_indices = @transform_15, window_bounds = array<i64: 8, 32>}]} {
    %c0 = arith.constant 0 : index
    %c0_0 = arith.constant 0 : index
    %0 = vector.load %arg1[%c0, %c0_0] : memref<8x32xf32, #tpu.memory_space<vmem>>, vector<8x32xf32>
    %c0_1 = arith.constant 0 : index
    %c0_2 = arith.constant 0 : index
    %1 = vector.load %arg2[%c0_1, %c0_2] : memref<8x32xf32, #tpu.memory_space<vmem>>, vector<8x32xf32>
    %2 = arith.truncf %0 : vector<8x32xf32> to vector<8x32xbf16>
    %c0_3 = arith.constant 0 : index
    %c0_4 = arith.constant 0 : index
    %3 = vector.load %arg7[%c0_3, %c0_4] : memref<32x32xbf16, #tpu.memory_space<vmem>>, vector<32x32xbf16>
    %cst = arith.constant dense<0.000000e+00> : vector<8x32xf32>
    %4 = tpu.matmul %2, %3, %cst {dimension_numbers = #tpu.dot_dimension_numbers<[1], [0], [0], [1], [0, 0, 1, 1], [], []>} : vector<8x32xbf16>, vector<32x32xbf16>, vector<8x32xf32> -> vector<8x32xf32>
    %c0_5 = arith.constant 0 : index
    %c0_6 = arith.constant 0 : index
    %5 = vector.load %arg8[%c0_5, %c0_6] : memref<1x32xf32, #tpu.memory_space<vmem>>, vector<1x32xf32>
    %6 = vector.broadcast %5 : vector<1x32xf32> to vector<8x32xf32>
    %7 = arith.addf %4, %6 : vector<8x32xf32>
    %8 = arith.truncf %1 : vector<8x32xf32> to vector<8x32xbf16>
    %c0_7 = arith.constant 0 : index
    %c0_8 = arith.constant 0 : index
    %9 = vector.load %arg9[%c0_7, %c0_8] : memref<32x32xbf16, #tpu.memory_space<vmem>>, vector<32x32xbf16>
    %cst_9 = arith.constant dense<0.000000e+00> : vector<8x32xf32>
    %10 = tpu.matmul %8, %9, %cst_9 {dimension_numbers = #tpu.dot_dimension_numbers<[1], [0], [0], [1], [0, 0, 1, 1], [], []>} : vector<8x32xbf16>, vector<32x32xbf16>, vector<8x32xf32> -> vector<8x32xf32>
    %c0_10 = arith.constant 0 : index
    %c0_11 = arith.constant 0 : index
    %11 = vector.load %arg10[%c0_10, %c0_11] : memref<1x32xf32, #tpu.memory_space<vmem>>, vector<1x32xf32>
    %12 = vector.broadcast %11 : vector<1x32xf32> to vector<8x32xf32>
    %13 = arith.addf %10, %12 : vector<8x32xf32>
    %c0_12 = arith.constant 0 : index
    %c0_13 = arith.constant 0 : index
    %14 = vector.load %arg4[%c0_12, %c0_13] : memref<8x128xbf16, #tpu.memory_space<vmem>>, vector<8x32xbf16>
    %15 = arith.extf %14 : vector<8x32xbf16> to vector<8x32xf32>
    %c0_14 = arith.constant 0 : index
    %c0_15 = arith.constant 0 : index
    %16 = vector.load %arg5[%c0_14, %c0_15] : memref<8x128xbf16, #tpu.memory_space<vmem>>, vector<8x32xbf16>
    %17 = arith.extf %16 : vector<8x32xbf16> to vector<8x32xf32>
    %18 = arith.mulf %15, %13 : vector<8x32xf32>
    %cst_16 = arith.constant dense<0.000000e+00> : vector<8xf32>
    %19 = vector.multi_reduction <add>, %18, %cst_16 [1] : vector<8x32xf32> to vector<8xf32>
    %20 = vector.shape_cast %19 : vector<8xf32> to vector<8x1xf32>
    %cst_17 = arith.constant 0.176776692 : f32
    %21 = vector.broadcast %cst_17 : f32 to vector<8x1xf32>
    %22 = arith.mulf %20, %21 : vector<8x1xf32>
    %23 = arith.mulf %17, %7 : vector<8x32xf32>
    %cst_18 = arith.constant dense<0.000000e+00> : vector<8xf32>
    %24 = vector.multi_reduction <add>, %23, %cst_18 [1] : vector<8x32xf32> to vector<8xf32>
    %25 = vector.shape_cast %24 : vector<8xf32> to vector<8x1xf32>
    %cst_19 = arith.constant 0.176776692 : f32
    %26 = vector.broadcast %cst_19 : f32 to vector<8x1xf32>
    %27 = arith.mulf %25, %26 : vector<8x1xf32>
    %c0_20 = arith.constant 0 : index
    %c32 = arith.constant 32 : index
    %28 = vector.load %arg4[%c0_20, %c32] : memref<8x128xbf16, #tpu.memory_space<vmem>>, vector<8x32xbf16>
    %29 = arith.extf %28 : vector<8x32xbf16> to vector<8x32xf32>
    %c0_21 = arith.constant 0 : index
    %c32_22 = arith.constant 32 : index
    %30 = vector.load %arg5[%c0_21, %c32_22] : memref<8x128xbf16, #tpu.memory_space<vmem>>, vector<8x32xbf16>
    %31 = arith.extf %30 : vector<8x32xbf16> to vector<8x32xf32>
    %32 = arith.mulf %29, %13 : vector<8x32xf32>
    %cst_23 = arith.constant dense<0.000000e+00> : vector<8xf32>
    %33 = vector.multi_reduction <add>, %32, %cst_23 [1] : vector<8x32xf32> to vector<8xf32>
    %34 = vector.shape_cast %33 : vector<8xf32> to vector<8x1xf32>
    %cst_24 = arith.constant 0.176776692 : f32
    %35 = vector.broadcast %cst_24 : f32 to vector<8x1xf32>
    %36 = arith.mulf %34, %35 : vector<8x1xf32>
    %37 = arith.mulf %31, %7 : vector<8x32xf32>
    %cst_25 = arith.constant dense<0.000000e+00> : vector<8xf32>
    %38 = vector.multi_reduction <add>, %37, %cst_25 [1] : vector<8x32xf32> to vector<8xf32>
    %39 = vector.shape_cast %38 : vector<8xf32> to vector<8x1xf32>
    %cst_26 = arith.constant 0.176776692 : f32
    %40 = vector.broadcast %cst_26 : f32 to vector<8x1xf32>
    %41 = arith.mulf %39, %40 : vector<8x1xf32>
    %c0_27 = arith.constant 0 : index
    %c64 = arith.constant 64 : index
    %42 = vector.load %arg4[%c0_27, %c64] : memref<8x128xbf16, #tpu.memory_space<vmem>>, vector<8x32xbf16>
    %43 = arith.extf %42 : vector<8x32xbf16> to vector<8x32xf32>
    %c0_28 = arith.constant 0 : index
    %c64_29 = arith.constant 64 : index
    %44 = vector.load %arg5[%c0_28, %c64_29] : memref<8x128xbf16, #tpu.memory_space<vmem>>, vector<8x32xbf16>
    %45 = arith.extf %44 : vector<8x32xbf16> to vector<8x32xf32>
    %46 = arith.mulf %43, %13 : vector<8x32xf32>
    %cst_30 = arith.constant dense<0.000000e+00> : vector<8xf32>
    %47 = vector.multi_reduction <add>, %46, %cst_30 [1] : vector<8x32xf32> to vector<8xf32>
    %48 = vector.shape_cast %47 : vector<8xf32> to vector<8x1xf32>
    %cst_31 = arith.constant 0.176776692 : f32
    %49 = vector.broadcast %cst_31 : f32 to vector<8x1xf32>
    %50 = arith.mulf %48, %49 : vector<8x1xf32>
    %51 = arith.mulf %45, %7 : vector<8x32xf32>
    %cst_32 = arith.constant dense<0.000000e+00> : vector<8xf32>
    %52 = vector.multi_reduction <add>, %51, %cst_32 [1] : vector<8x32xf32> to vector<8xf32>
    %53 = vector.shape_cast %52 : vector<8xf32> to vector<8x1xf32>
    %cst_33 = arith.constant 0.176776692 : f32
    %54 = vector.broadcast %cst_33 : f32 to vector<8x1xf32>
    %55 = arith.mulf %53, %54 : vector<8x1xf32>
    %c0_34 = arith.constant 0 : index
    %c96 = arith.constant 96 : index
    %56 = vector.load %arg4[%c0_34, %c96] : memref<8x128xbf16, #tpu.memory_space<vmem>>, vector<8x32xbf16>
    %57 = arith.extf %56 : vector<8x32xbf16> to vector<8x32xf32>
    %c0_35 = arith.constant 0 : index
    %c96_36 = arith.constant 96 : index
    %58 = vector.load %arg5[%c0_35, %c96_36] : memref<8x128xbf16, #tpu.memory_space<vmem>>, vector<8x32xbf16>
    %59 = arith.extf %58 : vector<8x32xbf16> to vector<8x32xf32>
    %60 = arith.mulf %57, %13 : vector<8x32xf32>
    %cst_37 = arith.constant dense<0.000000e+00> : vector<8xf32>
    %61 = vector.multi_reduction <add>, %60, %cst_37 [1] : vector<8x32xf32> to vector<8xf32>
    %62 = vector.shape_cast %61 : vector<8xf32> to vector<8x1xf32>
    %cst_38 = arith.constant 0.176776692 : f32
    %63 = vector.broadcast %cst_38 : f32 to vector<8x1xf32>
    %64 = arith.mulf %62, %63 : vector<8x1xf32>
    %65 = arith.mulf %59, %7 : vector<8x32xf32>
    %cst_39 = arith.constant dense<0.000000e+00> : vector<8xf32>
    %66 = vector.multi_reduction <add>, %65, %cst_39 [1] : vector<8x32xf32> to vector<8xf32>
    %67 = vector.shape_cast %66 : vector<8xf32> to vector<8x1xf32>
    %cst_40 = arith.constant 0.176776692 : f32
    %68 = vector.broadcast %cst_40 : f32 to vector<8x1xf32>
    %69 = arith.mulf %67, %68 : vector<8x1xf32>
    %70 = arith.maximumf %22, %36 : vector<8x1xf32>
    %71 = arith.maximumf %70, %50 : vector<8x1xf32>
    %72 = arith.maximumf %71, %64 : vector<8x1xf32>
    %73 = arith.subf %22, %72 : vector<8x1xf32>
    %74 = math.exp %73 : vector<8x1xf32>
    %75 = arith.subf %36, %72 : vector<8x1xf32>
    %76 = math.exp %75 : vector<8x1xf32>
    %77 = arith.subf %50, %72 : vector<8x1xf32>
    %78 = math.exp %77 : vector<8x1xf32>
    %79 = arith.subf %64, %72 : vector<8x1xf32>
    %80 = math.exp %79 : vector<8x1xf32>
    %81 = arith.addf %74, %76 : vector<8x1xf32>
    %82 = arith.addf %81, %78 : vector<8x1xf32>
    %83 = arith.addf %82, %80 : vector<8x1xf32>
    %cst_41 = arith.constant 1.000000e+00 : f32
    %84 = vector.broadcast %cst_41 : f32 to vector<8x1xf32>
    %85 = arith.divf %84, %83 : vector<8x1xf32>
    %86 = arith.mulf %74, %85 : vector<8x1xf32>
    %87 = arith.mulf %76, %85 : vector<8x1xf32>
    %88 = arith.mulf %78, %85 : vector<8x1xf32>
    %89 = arith.mulf %80, %85 : vector<8x1xf32>
    %90 = arith.maximumf %27, %41 : vector<8x1xf32>
    %91 = arith.maximumf %90, %55 : vector<8x1xf32>
    %92 = arith.maximumf %91, %69 : vector<8x1xf32>
    %93 = arith.subf %27, %92 : vector<8x1xf32>
    %94 = math.exp %93 : vector<8x1xf32>
    %95 = arith.subf %41, %92 : vector<8x1xf32>
    %96 = math.exp %95 : vector<8x1xf32>
    %97 = arith.subf %55, %92 : vector<8x1xf32>
    %98 = math.exp %97 : vector<8x1xf32>
    %99 = arith.subf %69, %92 : vector<8x1xf32>
    %100 = math.exp %99 : vector<8x1xf32>
    %101 = arith.addf %94, %96 : vector<8x1xf32>
    %102 = arith.addf %101, %98 : vector<8x1xf32>
    %103 = arith.addf %102, %100 : vector<8x1xf32>
    %cst_42 = arith.constant 1.000000e+00 : f32
    %104 = vector.broadcast %cst_42 : f32 to vector<8x1xf32>
    %105 = arith.divf %104, %103 : vector<8x1xf32>
    %106 = arith.mulf %94, %105 : vector<8x1xf32>
    %107 = arith.mulf %96, %105 : vector<8x1xf32>
    %108 = arith.mulf %98, %105 : vector<8x1xf32>
    %109 = arith.mulf %100, %105 : vector<8x1xf32>
    %c0_43 = arith.constant 0 : index
    %c0_44 = arith.constant 0 : index
    %110 = vector.load %arg3[%c0_43, %c0_44] : memref<8x128xbf16, #tpu.memory_space<vmem>>, vector<8x32xbf16>
    %111 = arith.extf %110 : vector<8x32xbf16> to vector<8x32xf32>
    %112 = vector.broadcast %86 : vector<8x1xf32> to vector<8x32xf32>
    %113 = arith.mulf %112, %111 : vector<8x32xf32>
    %c0_45 = arith.constant 0 : index
    %c0_46 = arith.constant 0 : index
    %114 = vector.load %arg6[%c0_45, %c0_46] : memref<8x128xbf16, #tpu.memory_space<vmem>>, vector<8x32xbf16>
    %115 = arith.extf %114 : vector<8x32xbf16> to vector<8x32xf32>
    %116 = vector.broadcast %106 : vector<8x1xf32> to vector<8x32xf32>
    %117 = arith.mulf %116, %115 : vector<8x32xf32>
    %c0_47 = arith.constant 0 : index
    %c32_48 = arith.constant 32 : index
    %118 = vector.load %arg3[%c0_47, %c32_48] : memref<8x128xbf16, #tpu.memory_space<vmem>>, vector<8x32xbf16>
    %119 = arith.extf %118 : vector<8x32xbf16> to vector<8x32xf32>
    %120 = vector.broadcast %87 : vector<8x1xf32> to vector<8x32xf32>
    %121 = arith.mulf %120, %119 : vector<8x32xf32>
    %122 = arith.addf %113, %121 : vector<8x32xf32>
    %c0_49 = arith.constant 0 : index
    %c32_50 = arith.constant 32 : index
    %123 = vector.load %arg6[%c0_49, %c32_50] : memref<8x128xbf16, #tpu.memory_space<vmem>>, vector<8x32xbf16>
    %124 = arith.extf %123 : vector<8x32xbf16> to vector<8x32xf32>
    %125 = vector.broadcast %107 : vector<8x1xf32> to vector<8x32xf32>
    %126 = arith.mulf %125, %124 : vector<8x32xf32>
    %127 = arith.addf %117, %126 : vector<8x32xf32>
    %c0_51 = arith.constant 0 : index
    %c64_52 = arith.constant 64 : index
    %128 = vector.load %arg3[%c0_51, %c64_52] : memref<8x128xbf16, #tpu.memory_space<vmem>>, vector<8x32xbf16>
    %129 = arith.extf %128 : vector<8x32xbf16> to vector<8x32xf32>
    %130 = vector.broadcast %88 : vector<8x1xf32> to vector<8x32xf32>
    %131 = arith.mulf %130, %129 : vector<8x32xf32>
    %132 = arith.addf %122, %131 : vector<8x32xf32>
    %c0_53 = arith.constant 0 : index
    %c64_54 = arith.constant 64 : index
    %133 = vector.load %arg6[%c0_53, %c64_54] : memref<8x128xbf16, #tpu.memory_space<vmem>>, vector<8x32xbf16>
    %134 = arith.extf %133 : vector<8x32xbf16> to vector<8x32xf32>
    %135 = vector.broadcast %108 : vector<8x1xf32> to vector<8x32xf32>
    %136 = arith.mulf %135, %134 : vector<8x32xf32>
    %137 = arith.addf %127, %136 : vector<8x32xf32>
    %c0_55 = arith.constant 0 : index
    %c96_56 = arith.constant 96 : index
    %138 = vector.load %arg3[%c0_55, %c96_56] : memref<8x128xbf16, #tpu.memory_space<vmem>>, vector<8x32xbf16>
    %139 = arith.extf %138 : vector<8x32xbf16> to vector<8x32xf32>
    %140 = vector.broadcast %89 : vector<8x1xf32> to vector<8x32xf32>
    %141 = arith.mulf %140, %139 : vector<8x32xf32>
    %142 = arith.addf %132, %141 : vector<8x32xf32>
    %c0_57 = arith.constant 0 : index
    %c96_58 = arith.constant 96 : index
    %143 = vector.load %arg6[%c0_57, %c96_58] : memref<8x128xbf16, #tpu.memory_space<vmem>>, vector<8x32xbf16>
    %144 = arith.extf %143 : vector<8x32xbf16> to vector<8x32xf32>
    %145 = vector.broadcast %109 : vector<8x1xf32> to vector<8x32xf32>
    %146 = arith.mulf %145, %144 : vector<8x32xf32>
    %147 = arith.addf %137, %146 : vector<8x32xf32>
    %148 = arith.negf %7 : vector<8x32xf32>
    %149 = math.exp %148 : vector<8x32xf32>
    %cst_59 = arith.constant 1.000000e+00 : f32
    %150 = vector.broadcast %cst_59 : f32 to vector<8x32xf32>
    %151 = arith.addf %150, %149 : vector<8x32xf32>
    %152 = arith.divf %150, %151 : vector<8x32xf32>
    %153 = arith.negf %13 : vector<8x32xf32>
    %154 = math.exp %153 : vector<8x32xf32>
    %cst_60 = arith.constant 1.000000e+00 : f32
    %155 = vector.broadcast %cst_60 : f32 to vector<8x32xf32>
    %156 = arith.addf %155, %154 : vector<8x32xf32>
    %157 = arith.divf %155, %156 : vector<8x32xf32>
    %158 = arith.subf %0, %142 : vector<8x32xf32>
    %159 = arith.mulf %152, %158 : vector<8x32xf32>
    %160 = arith.addf %142, %159 : vector<8x32xf32>
    %161 = arith.subf %1, %147 : vector<8x32xf32>
    %162 = arith.mulf %157, %161 : vector<8x32xf32>
    %163 = arith.addf %147, %162 : vector<8x32xf32>
    %164 = arith.truncf %160 : vector<8x32xf32> to vector<8x32xbf16>
    %c0_61 = arith.constant 0 : index
    %c0_62 = arith.constant 0 : index
    %165 = vector.load %arg11[%c0_61, %c0_62] : memref<32x384xbf16, #tpu.memory_space<vmem>>, vector<32x384xbf16>
    %cst_63 = arith.constant dense<0.000000e+00> : vector<8x384xf32>
    %166 = tpu.matmul %164, %165, %cst_63 {dimension_numbers = #tpu.dot_dimension_numbers<[1], [0], [0], [1], [0, 0, 1, 1], [], []>} : vector<8x32xbf16>, vector<32x384xbf16>, vector<8x384xf32> -> vector<8x384xf32>
    %c0_64 = arith.constant 0 : index
    %c0_65 = arith.constant 0 : index
    %167 = vector.load %arg12[%c0_64, %c0_65] : memref<1x384xf32, #tpu.memory_space<vmem>>, vector<1x384xf32>
    %168 = vector.broadcast %167 : vector<1x384xf32> to vector<8x384xf32>
    %169 = arith.addf %166, %168 : vector<8x384xf32>
    %170 = arith.truncf %163 : vector<8x32xf32> to vector<8x32xbf16>
    %c0_66 = arith.constant 0 : index
    %c0_67 = arith.constant 0 : index
    %171 = vector.load %arg13[%c0_66, %c0_67] : memref<32x384xbf16, #tpu.memory_space<vmem>>, vector<32x384xbf16>
    %cst_68 = arith.constant dense<0.000000e+00> : vector<8x384xf32>
    %172 = tpu.matmul %170, %171, %cst_68 {dimension_numbers = #tpu.dot_dimension_numbers<[1], [0], [0], [1], [0, 0, 1, 1], [], []>} : vector<8x32xbf16>, vector<32x384xbf16>, vector<8x384xf32> -> vector<8x384xf32>
    %c0_69 = arith.constant 0 : index
    %c0_70 = arith.constant 0 : index
    %173 = vector.load %arg14[%c0_69, %c0_70] : memref<1x384xf32, #tpu.memory_space<vmem>>, vector<1x384xf32>
    %174 = vector.broadcast %173 : vector<1x384xf32> to vector<8x384xf32>
    %175 = arith.addf %172, %174 : vector<8x384xf32>
    %176 = vector.extract_strided_slice %169 {offsets = [0, 0], sizes = [8, 128], strides = [1, 1]} : vector<8x384xf32> to vector<8x128xf32>
    %177 = arith.negf %176 : vector<8x128xf32>
    %178 = math.exp %177 : vector<8x128xf32>
    %cst_71 = arith.constant 1.000000e+00 : f32
    %179 = vector.broadcast %cst_71 : f32 to vector<8x128xf32>
    %180 = arith.addf %179, %178 : vector<8x128xf32>
    %181 = arith.divf %179, %180 : vector<8x128xf32>
    %182 = vector.extract_strided_slice %175 {offsets = [0, 0], sizes = [8, 128], strides = [1, 1]} : vector<8x384xf32> to vector<8x128xf32>
    %183 = arith.negf %182 : vector<8x128xf32>
    %184 = math.exp %183 : vector<8x128xf32>
    %cst_72 = arith.constant 1.000000e+00 : f32
    %185 = vector.broadcast %cst_72 : f32 to vector<8x128xf32>
    %186 = arith.addf %185, %184 : vector<8x128xf32>
    %187 = arith.divf %185, %186 : vector<8x128xf32>
    %188 = vector.extract_strided_slice %169 {offsets = [0, 128], sizes = [8, 128], strides = [1, 1]} : vector<8x384xf32> to vector<8x128xf32>
    %189 = vector.extract_strided_slice %169 {offsets = [0, 256], sizes = [8, 128], strides = [1, 1]} : vector<8x384xf32> to vector<8x128xf32>
    %190 = vector.extract_strided_slice %175 {offsets = [0, 128], sizes = [8, 128], strides = [1, 1]} : vector<8x384xf32> to vector<8x128xf32>
    %191 = vector.extract_strided_slice %175 {offsets = [0, 256], sizes = [8, 128], strides = [1, 1]} : vector<8x384xf32> to vector<8x128xf32>
    %192 = arith.subf %188, %190 : vector<8x128xf32>
    %193 = arith.mulf %181, %192 : vector<8x128xf32>
    %194 = arith.addf %190, %193 : vector<8x128xf32>
    %195 = arith.subf %191, %189 : vector<8x128xf32>
    %196 = arith.mulf %187, %195 : vector<8x128xf32>
    %197 = arith.addf %189, %196 : vector<8x128xf32>
    %198 = vector.extract_strided_slice %194 {offsets = [0, 0], sizes = [8, 32], strides = [1, 1]} : vector<8x128xf32> to vector<8x32xf32>
    %c0_73 = arith.constant 0 : index
    %c0_74 = arith.constant 0 : index
    %199 = vector.load %arg15[%c0_73, %c0_74] : memref<8x32xf32, #tpu.memory_space<vmem>>, vector<8x32xf32>
    tpu.vector_store %arg15[%c0_73, %c0_74], %198 {strides = array<i32>} : memref<8x32xf32, #tpu.memory_space<vmem>>, vector<8x32xf32>,
    %200 = vector.extract_strided_slice %197 {offsets = [0, 0], sizes = [8, 32], strides = [1, 1]} : vector<8x128xf32> to vector<8x32xf32>
    %c0_75 = arith.constant 0 : index
    %c0_76 = arith.constant 0 : index
    %201 = vector.load %arg16[%c0_75, %c0_76] : memref<8x32xf32, #tpu.memory_space<vmem>>, vector<8x32xf32>
    tpu.vector_store %arg16[%c0_75, %c0_76], %200 {strides = array<i32>} : memref<8x32xf32, #tpu.memory_space<vmem>>, vector<8x32xf32>,
    return
  }
  func.func @transform_0(%arg0: i32) -> (i32, i32) {
    %c0_i32 = arith.constant 0 : i32
    %c0_i32_0 = arith.constant 0 : i32
    return %arg0, %c0_i32 : i32, i32
  }
  func.func @transform_1(%arg0: i32) -> (i32, i32) {
    %c0_i32 = arith.constant 0 : i32
    %c0_i32_0 = arith.constant 0 : i32
    return %arg0, %c0_i32 : i32, i32
  }
  func.func @transform_2(%arg0: i32) -> (i32, i32) {
    %c0_i32 = arith.constant 0 : i32
    %c0_i32_0 = arith.constant 0 : i32
    return %arg0, %c0_i32 : i32, i32
  }
  func.func @transform_3(%arg0: i32) -> (i32, i32) {
    %c0_i32 = arith.constant 0 : i32
    %c0_i32_0 = arith.constant 0 : i32
    return %arg0, %c0_i32 : i32, i32
  }
  func.func @transform_4(%arg0: i32) -> (i32, i32) {
    %c0_i32 = arith.constant 0 : i32
    %c0_i32_0 = arith.constant 0 : i32
    return %arg0, %c0_i32 : i32, i32
  }
  func.func @transform_5(%arg0: i32) -> (i32, i32) {
    %c0_i32 = arith.constant 0 : i32
    %c0_i32_0 = arith.constant 0 : i32
    return %arg0, %c0_i32 : i32, i32
  }
  func.func @transform_6(%arg0: i32) -> (i32, i32) {
    %c0_i32 = arith.constant 0 : i32
    %c0_i32_0 = arith.constant 0 : i32
    %c0_i32_1 = arith.constant 0 : i32
    return %c0_i32, %c0_i32_0 : i32, i32
  }
  func.func @transform_7(%arg0: i32) -> (i32, i32) {
    %c0_i32 = arith.constant 0 : i32
    %c0_i32_0 = arith.constant 0 : i32
    %c0_i32_1 = arith.constant 0 : i32
    return %c0_i32, %c0_i32_0 : i32, i32
  }
  func.func @transform_8(%arg0: i32) -> (i32, i32) {
    %c0_i32 = arith.constant 0 : i32
    %c0_i32_0 = arith.constant 0 : i32
    %c0_i32_1 = arith.constant 0 : i32
    return %c0_i32, %c0_i32_0 : i32, i32
  }
  func.func @transform_9(%arg0: i32) -> (i32, i32) {
    %c0_i32 = arith.constant 0 : i32
    %c0_i32_0 = arith.constant 0 : i32
    %c0_i32_1 = arith.constant 0 : i32
    return %c0_i32, %c0_i32_0 : i32, i32
  }
  func.func @transform_10(%arg0: i32) -> (i32, i32) {
    %c0_i32 = arith.constant 0 : i32
    %c0_i32_0 = arith.constant 0 : i32
    %c0_i32_1 = arith.constant 0 : i32
    return %c0_i32, %c0_i32_0 : i32, i32
  }
  func.func @transform_11(%arg0: i32) -> (i32, i32) {
    %c0_i32 = arith.constant 0 : i32
    %c0_i32_0 = arith.constant 0 : i32
    %c0_i32_1 = arith.constant 0 : i32
    return %c0_i32, %c0_i32_0 : i32, i32
  }
  func.func @transform_12(%arg0: i32) -> (i32, i32) {
    %c0_i32 = arith.constant 0 : i32
    %c0_i32_0 = arith.constant 0 : i32
    %c0_i32_1 = arith.constant 0 : i32
    return %c0_i32, %c0_i32_0 : i32, i32
  }
  func.func @transform_13(%arg0: i32) -> (i32, i32) {
    %c0_i32 = arith.constant 0 : i32
    %c0_i32_0 = arith.constant 0 : i32
    %c0_i32_1 = arith.constant 0 : i32
    return %c0_i32, %c0_i32_0 : i32, i32
  }
  func.func @transform_14(%arg0: i32) -> (i32, i32) {
    %c0_i32 = arith.constant 0 : i32
    %c0_i32_0 = arith.constant 0 : i32
    return %arg0, %c0_i32 : i32, i32
  }
  func.func @transform_15(%arg0: i32) -> (i32, i32) {
    %c0_i32 = arith.constant 0 : i32
    %c0_i32_0 = arith.constant 0 : i32
    return %arg0, %c0_i32 : i32, i32
  }
}

</mosaic_0001>

<llo_original>
// kernel: tpu_custom_call.1
$region0: #{tpu_custom_call.1}
  #allocation0 [shape = 'u32[]', space=smem, size = 0x4, offset = 0x4, fixed_abs, tag = 'smem constant byte address 0x4 - core index']
  #allocation1 [shape = 'u32[144,128]{1,0:T(1,128)}', space=vmem, size = 0x12000, scoped, tag = 'internal scratch']
  %s0 = inlined_call_operand.hbm [shape: f32[8,32], index: 0, kind: input, shape index: {}]
  %s1 = inlined_call_operand.hbm [shape: f32[8,32], index: 1, kind: input, shape index: {}]
  %s2 = inlined_call_operand.hbm [shape: bf16[8,128], index: 2, kind: input, shape index: {}]
  %s3 = inlined_call_operand.vmem [shape: bf16[8,128], index: 3, kind: input, shape index: {}]
  %s4 = inlined_call_operand.hbm [shape: bf16[8,128], index: 4, kind: input, shape index: {}]
  %s5 = inlined_call_operand.vmem [shape: bf16[8,128], index: 5, kind: input, shape index: {}]
  %s6 = inlined_call_operand.hbm [shape: bf16[32,32], index: 6, kind: input, shape index: {}]
  %s7 = inlined_call_operand.hbm [shape: f32[1,32], index: 7, kind: input, shape index: {}]
  %s8 = inlined_call_operand.hbm [shape: bf16[32,32], index: 8, kind: input, shape index: {}]
  %s9 = inlined_call_operand.vmem [shape: f32[1,32], index: 9, kind: input, shape index: {}]
  %s10 = inlined_call_operand.hbm [shape: bf16[32,384], index: 10, kind: input, shape index: {}]
  %s11 = inlined_call_operand.vmem [shape: f32[1,384], index: 11, kind: input, shape index: {}]
  %s12 = inlined_call_operand.hbm [shape: bf16[32,384], index: 12, kind: input, shape index: {}]
  %s13 = inlined_call_operand.vmem [shape: f32[1,384], index: 13, kind: input, shape index: {}]
  %s14 = inlined_call_operand.hbm [shape: f32[8,32], index: 14, kind: output, shape index: {0}]
  %s15 = inlined_call_operand.hbm [shape: f32[8,32], index: 15, kind: output, shape index: {1}]
  %16 = xla_tuple %s14, %s15
  %s17 = sld [smem:[#allocation0]]
  $region110: #{tpu_custom_call.1} parent=0
    _
  %s19 = ssub.s32 1, %s17
  %s20 = scalar_select 0, %s19, %s17
  $region1: #{tpu_custom_call.1} parent=0
    #allocation2 [shape = 'u8[4096]{0}', space=vmem, size = 0x1000, scoped, tag = 'input window, operand 0, single buffered']
    #allocation3 [shape = 's32[1]{0}', space=sflag, size = 0x4, scoped, tag = 'scoped memory for tpu_custom_call.1']
    #allocation4 [shape = 's32[1]{0}', space=sflag, size = 0x4, scoped, tag = 'scoped memory for tpu_custom_call.1']
    #allocation5 [shape = 'u8[4096]{0}', space=vmem, size = 0x1000, scoped, tag = 'input window, operand 1, single buffered']
    #allocation6 [shape = 's32[1]{0}', space=sflag, size = 0x4, scoped, tag = 'scoped memory for tpu_custom_call.1']
    #allocation7 [shape = 'u8[2048]{0}', space=vmem, size = 0x800, scoped, tag = 'input window, operand 2, single buffered']
    #allocation8 [shape = 'u8[2048]{0}', space=vmem, size = 0x800, scoped, tag = 'input window, operand 4, single buffered']
    #allocation9 [shape = 's32[1]{0}', space=sflag, size = 0x4, scoped, tag = 'scoped memory for tpu_custom_call.1']
    #allocation10 [shape = 'u8[8192]{0}', space=vmem, size = 0x2000, scoped, tag = 'input window, operand 6, single buffered']
    #allocation11 [shape = 'u8[512]{0}', space=vmem, size = 0x400, scoped, tag = 'input window, operand 7, single buffered']
    #allocation12 [shape = 's32[1]{0}', space=sflag, size = 0x4, scoped, tag = 'scoped memory for tpu_custom_call.1']
    #allocation13 [shape = 'u8[8192]{0}', space=vmem, size = 0x2000, scoped, tag = 'input window, operand 8, single buffered']
    #allocation14 [shape = 'u8[24576]{0}', space=vmem, size = 0x6000, scoped, tag = 'input window, operand 10, single buffered']
    #allocation15 [shape = 's32[1]{0}', space=sflag, size = 0x4, scoped, tag = 'scoped memory for tpu_custom_call.1']
    #allocation16 [shape = 'u8[24576]{0}', space=vmem, size = 0x6000, scoped, tag = 'input window, operand 12, single buffered']
    #allocation17 [shape = 'u8[4096]{0}', space=vmem, size = 0x1000, scoped, tag = 'output window, operand 0, single buffered']
    #allocation18 [shape = 'u8[4096]{0}', space=vmem, size = 0x1000, scoped, tag = 'output window, operand 1, single buffered']
    #allocation19 [shape = 's32[1]{0}', space=sflag, size = 0x4, scoped, tag = 'scoped memory for tpu_custom_call.1']
    %21 = vsyncpa [#allocation3], 0
    %22 = vsyncpa [#allocation6], 0
    %23 = vsyncpa [#allocation9], 0
    %24 = vsyncpa [#allocation12], 0
    %25 = vsyncpa [#allocation15], 0
    %26 = vsyncpa [#allocation4], 0
    %27 = vsyncpa [#allocation19], 0
    // Predicated region
    $region2: #{tpu_custom_call.1} parent=1 // pred_check
      _
    $region3: #{tpu_custom_call.1} parent=1 // pred_check_branch
      %29 = sbr.rel (0) target = $region5
    $region4: #{tpu_custom_call.1} parent=1 // pred_region
      %s31 = ssub.s32 128, 128
      %32 = vsyncadd [#allocation3], %s31
      %s34 = sshll.u32 [#allocation2], 4
      %s35 = int_to_ptr.vmem [resolvable:$true] %s34
      %37 = dma.hbm_to_vmem [thread:$0]  %s0, 128, %s35, [#allocation3]
    $region5: #{tpu_custom_call.1} parent=1 // pred_fallthru
      _
    // Predicated region
    $region6: #{tpu_custom_call.1} parent=1 // pred_check
      _
    $region7: #{tpu_custom_call.1} parent=1 // pred_check_branch
      %39 = sbr.rel (0) target = $region9
    $region8: #{tpu_custom_call.1} parent=1 // pred_region
      %s41 = ssub.s32 128, 128
      %42 = vsyncadd [#allocation6], %s41
      %s44 = sshll.u32 [#allocation5], 4
      %s45 = int_to_ptr.vmem [resolvable:$true] %s44
      %47 = dma.hbm_to_vmem [thread:$0]  %s1, 128, %s45, [#allocation6]
    $region9: #{tpu_custom_call.1} parent=1 // pred_fallthru
      _
    // Predicated region
    $region10: #{tpu_custom_call.1} parent=1 // pred_check
      _
    $region11: #{tpu_custom_call.1} parent=1 // pred_check_branch
      %49 = sbr.rel (0) target = $region13
    $region12: #{tpu_custom_call.1} parent=1 // pred_region
      %s51 = ssub.s32 64, 64
      %52 = vsyncadd [#allocation6], %s51
      %s54 = sshll.u32 [#allocation7], 4
      %s55 = int_to_ptr.vmem [resolvable:$true] %s54
      %57 = dma.hbm_to_vmem [thread:$0]  %s2, 64, %s55, [#allocation6]
    $region13: #{tpu_custom_call.1} parent=1 // pred_fallthru
      _
    // Predicated region
    $region14: #{tpu_custom_call.1} parent=1 // pred_check
      _
    $region15: #{tpu_custom_call.1} parent=1 // pred_check_branch
      %59 = sbr.rel (0) target = $region17
    $region16: #{tpu_custom_call.1} parent=1 // pred_region
      _
    $region17: #{tpu_custom_call.1} parent=1 // pred_fallthru
      _
    // Predicated region
    $region18: #{tpu_custom_call.1} parent=1 // pred_check
      _
    $region19: #{tpu_custom_call.1} parent=1 // pred_check_branch
      %61 = sbr.rel (0) target = $region21
    $region20: #{tpu_custom_call.1} parent=1 // pred_region
      %s63 = ssub.s32 64, 64
      %64 = vsyncadd [#allocation9], %s63
      %s66 = sshll.u32 [#allocation8], 4
      %s67 = int_to_ptr.vmem [resolvable:$true] %s66
      %69 = dma.hbm_to_vmem [thread:$0]  %s4, 64, %s67, [#allocation9]
    $region21: #{tpu_custom_call.1} parent=1 // pred_fallthru
      _
    // Predicated region
    $region22: #{tpu_custom_call.1} parent=1 // pred_check
      _
    $region23: #{tpu_custom_call.1} parent=1 // pred_check_branch
      %71 = sbr.rel (0) target = $region25
    $region24: #{tpu_custom_call.1} parent=1 // pred_region
      _
    $region25: #{tpu_custom_call.1} parent=1 // pred_fallthru
      _
    // Predicated region
    $region26: #{tpu_custom_call.1} parent=1 // pred_check
      _
    $region27: #{tpu_custom_call.1} parent=1 // pred_check_branch
      %73 = sbr.rel (0) target = $region29
    $region28: #{tpu_custom_call.1} parent=1 // pred_region
      %s75 = ssub.s32 256, 256
      %76 = vsyncadd [#allocation9], %s75
      %s77 = sshll.u32 [#allocation10], 4
      %s78 = int_to_ptr.vmem [resolvable:$true] %s77
      %83 = dma.hbm_to_vmem [thread:$0]  %s6, 256, %s78, [#allocation9], 64, 64, 4
    $region29: #{tpu_custom_call.1} parent=1 // pred_fallthru
      _
    // Predicated region
    $region30: #{tpu_custom_call.1} parent=1 // pred_check
      _
    $region31: #{tpu_custom_call.1} parent=1 // pred_check_branch
      %85 = sbr.rel (0) target = $region33
    $region32: #{tpu_custom_call.1} parent=1 // pred_region
      %s87 = ssub.s32 16, 16
      %88 = vsyncadd [#allocation12], %s87
      %s90 = sshll.u32 [#allocation11], 4
      %s91 = int_to_ptr.vmem [resolvable:$true] %s90
      %93 = dma.hbm_to_vmem [thread:$0]  %s7, 16, %s91, [#allocation12]
    $region33: #{tpu_custom_call.1} parent=1 // pred_fallthru
      _
    // Predicated region
    $region34: #{tpu_custom_call.1} parent=1 // pred_check
      _
    $region35: #{tpu_custom_call.1} parent=1 // pred_check_branch
      %95 = sbr.rel (0) target = $region37
    $region36: #{tpu_custom_call.1} parent=1 // pred_region
      %s97 = ssub.s32 256, 256
      %98 = vsyncadd [#allocation12], %s97
      %s99 = sshll.u32 [#allocation13], 4
      %s100 = int_to_ptr.vmem [resolvable:$true] %s99
      %105 = dma.hbm_to_vmem [thread:$0]  %s8, 256, %s100, [#allocation12], 64, 64, 4
    $region37: #{tpu_custom_call.1} parent=1 // pred_fallthru
      _
    // Predicated region
    $region38: #{tpu_custom_call.1} parent=1 // pred_check
      _
    $region39: #{tpu_custom_call.1} parent=1 // pred_check_branch
      %107 = sbr.rel (0) target = $region41
    $region40: #{tpu_custom_call.1} parent=1 // pred_region
      _
    $region41: #{tpu_custom_call.1} parent=1 // pred_fallthru
      _
    // Predicated region
    $region42: #{tpu_custom_call.1} parent=1 // pred_check
      _
    $region43: #{tpu_custom_call.1} parent=1 // pred_check_branch
      %109 = sbr.rel (0) target = $region45
    $region44: #{tpu_custom_call.1} parent=1 // pred_region
      %s111 = ssub.s32 768, 768
      %112 = vsyncadd [#allocation15], %s111
      %s113 = sshll.u32 [#allocation14], 4
      %s114 = int_to_ptr.vmem [resolvable:$true] %s113
      %119 = dma.hbm_to_vmem [thread:$0]  %s10, 768, %s114, [#allocation15], 192, 192, 12
    $region45: #{tpu_custom_call.1} parent=1 // pred_fallthru
      _
    // Predicated region
    $region46: #{tpu_custom_call.1} parent=1 // pred_check
      _
    $region47: #{tpu_custom_call.1} parent=1 // pred_check_branch
      %121 = sbr.rel (0) target = $region49
    $region48: #{tpu_custom_call.1} parent=1 // pred_region
      _
    $region49: #{tpu_custom_call.1} parent=1 // pred_fallthru
      _
    // Predicated region
    $region50: #{tpu_custom_call.1} parent=1 // pred_check
      _
    $region51: #{tpu_custom_call.1} parent=1 // pred_check_branch
      %123 = sbr.rel (0) target = $region53
    $region52: #{tpu_custom_call.1} parent=1 // pred_region
      %s125 = ssub.s32 768, 768
      %126 = vsyncadd [#allocation15], %s125
      %s127 = sshll.u32 [#allocation16], 4
      %s128 = int_to_ptr.vmem [resolvable:$true] %s127
      %133 = dma.hbm_to_vmem [thread:$0]  %s12, 768, %s128, [#allocation15], 192, 192, 12
    $region53: #{tpu_custom_call.1} parent=1 // pred_fallthru
      _
    // Predicated region
    $region54: #{tpu_custom_call.1} parent=1 // pred_check
      _
    $region55: #{tpu_custom_call.1} parent=1 // pred_check_branch
      %135 = sbr.rel (0) target = $region57
    $region56: #{tpu_custom_call.1} parent=1 // pred_region
      _
    $region57: #{tpu_custom_call.1} parent=1 // pred_fallthru
      _
    // Predicated region
    $region58: #{tpu_custom_call.1} parent=1 // pred_check
      _
    $region59: #{tpu_custom_call.1} parent=1 // pred_check_branch
      %137 = sbr.rel (0) target = $region61
    $region60: #{tpu_custom_call.1} parent=1 // pred_region
      %138 = dma.done [#allocation3], 128
    $region61: #{tpu_custom_call.1} parent=1 // pred_fallthru
      _
    // Predicated region
    $region62: #{tpu_custom_call.1} parent=1 // pred_check
      _
    $region63: #{tpu_custom_call.1} parent=1 // pred_check_branch
      %140 = sbr.rel (0) target = $region65
    $region64: #{tpu_custom_call.1} parent=1 // pred_region
      %141 = dma.done [#allocation6], 128
    $region65: #{tpu_custom_call.1} parent=1 // pred_fallthru
      _
    // Predicated region
    $region66: #{tpu_custom_call.1} parent=1 // pred_check
      _
    $region67: #{tpu_custom_call.1} parent=1 // pred_check_branch
      %143 = sbr.rel (0) target = $region69
    $region68: #{tpu_custom_call.1} parent=1 // pred_region
      %144 = dma.done [#allocation6], 64
    $region69: #{tpu_custom_call.1} parent=1 // pred_fallthru
      _
    // Predicated region
    $region70: #{tpu_custom_call.1} parent=1 // pred_check
      _
    $region71: #{tpu_custom_call.1} parent=1 // pred_check_branch
      %146 = sbr.rel (0) target = $region73
    $region72: #{tpu_custom_call.1} parent=1 // pred_region
      %147 = dma.done [#allocation9], 64
    $region73: #{tpu_custom_call.1} parent=1 // pred_fallthru
      _
    // Predicated region
    $region74: #{tpu_custom_call.1} parent=1 // pred_check
      _
    $region75: #{tpu_custom_call.1} parent=1 // pred_check_branch
      %149 = sbr.rel (0) target = $region77
    $region76: #{tpu_custom_call.1} parent=1 // pred_region
      %150 = dma.done [#allocation9], 256
    $region77: #{tpu_custom_call.1} parent=1 // pred_fallthru
      _
    // Predicated region
    $region78: #{tpu_custom_call.1} parent=1 // pred_check
      _
    $region79: #{tpu_custom_call.1} parent=1 // pred_check_branch
      %152 = sbr.rel (0) target = $region81
    $region80: #{tpu_custom_call.1} parent=1 // pred_region
      %153 = dma.done [#allocation12], 16
    $region81: #{tpu_custom_call.1} parent=1 // pred_fallthru
      _
    // Predicated region
    $region82: #{tpu_custom_call.1} parent=1 // pred_check
      _
    $region83: #{tpu_custom_call.1} parent=1 // pred_check_branch
      %155 = sbr.rel (0) target = $region85
    $region84: #{tpu_custom_call.1} parent=1 // pred_region
      %156 = dma.done [#allocation12], 256
    $region85: #{tpu_custom_call.1} parent=1 // pred_fallthru
      _
    // Predicated region
    $region86: #{tpu_custom_call.1} parent=1 // pred_check
      _
    $region87: #{tpu_custom_call.1} parent=1 // pred_check_branch
      %158 = sbr.rel (0) target = $region89
    $region88: #{tpu_custom_call.1} parent=1 // pred_region
      %159 = dma.done [#allocation15], 768
    $region89: #{tpu_custom_call.1} parent=1 // pred_fallthru
      _
    // Predicated region
    $region90: #{tpu_custom_call.1} parent=1 // pred_check
      _
    $region91: #{tpu_custom_call.1} parent=1 // pred_check_branch
      %161 = sbr.rel (0) target = $region93
    $region92: #{tpu_custom_call.1} parent=1 // pred_region
      %162 = dma.done [#allocation15], 768
    $region93: #{tpu_custom_call.1} parent=1 // pred_fallthru
      _
    %v164 = vld [vmem:[#allocation2] sm:$0xff]
    %v165 = vld [vmem:[#allocation5] sm:$0xff]
    %v166 = vpack.c.bf16 %v164, %v164
    %v167 = vld [vmem:[#allocation10] sm:$0xf]
    %v168 = vld [vmem:[#allocation10 + $0x4] sm:$0xf]
    %v169 = vld [vmem:[#allocation10 + $0x8] sm:$0xf]
    %v170 = vld [vmem:[#allocation10 + $0xc] sm:$0xf]
    %v171 = vld [vmem:[#allocation11] sm:$0x1]
    %v173 = vlaneseq
    %v174 = vshrl.u32 %v173, 7
    %v175 = vsub.s32 0, %v174
    %v176 = vrot.slane %v171, %v175
    %v182 = vunpack.c.l.b16 %v167
    %v183 = vunpack.c.l.b16 %v168
    %v184 = vunpack.c.l.b16 %v169
    %v185 = vunpack.c.l.b16 %v170
    %v186 = vpack.c.b16 %v183, %v182
    %v187 = vpack.c.b16 %v185, %v184
    %vm190 = vcmask 261120
    %v192 = vsel %vm190, %v166, 0
    %194 = vmatprep.subr.bf16.mxu0 0
    %195 = vmatpush1.bf16.msra.mxu0 0
    %196 = vmatprep.subr.bf16.mxu0 0
    %197 = vmatpush1.bf16.msra.mxu0 0
    %198 = vmatprep.subr.bf16.mxu0 0
    %199 = vmatpush1.bf16.msra.mxu0 0
    %200 = vmatprep.subr.bf16.mxu0 0
    %201 = vmatpush1.bf16.msra.mxu0 0
    %202 = vmatprep.subr.bf16.mxu0 0
    %203 = vmatpush1.bf16.msra.mxu0 0
    %204 = vmatprep.subr.bf16.mxu0 0
    %205 = vmatpush1.bf16.msra.mxu0 0
    %206 = vmatprep.subr.bf16.mxu0 0
    %207 = vmatpush1.bf16.msra.mxu0 %v187
    %208 = vmatprep.subr.bf16.mxu0 0
    %209 = vmatpush1.bf16.msra.mxu0 %v186
    %210 = vmatprep.subr.bf16.mxu0 0
    %211 = vmatpush2.bf16.msra.mxu0 0
    %212 = vmatprep.subr.bf16.mxu0 0
    %213 = vmatpush2.bf16.msra.mxu0 0
    %214 = vmatprep.subr.bf16.mxu0 0
    %215 = vmatpush2.bf16.msra.mxu0 0
    %216 = vmatprep.subr.bf16.mxu0 0
    %217 = vmatpush2.bf16.msra.mxu0 0
    %218 = vmatprep.subr.bf16.mxu0 0
    %219 = vmatpush2.bf16.msra.mxu0 0
    %220 = vmatprep.subr.bf16.mxu0 0
    %221 = vmatpush2.bf16.msra.mxu0 0
    %222 = vmatprep.subr.bf16.mxu0 0
    %223 = vmatpush2.bf16.msra.mxu0 0
    %224 = vmatprep.subr.bf16.mxu0 0
    %225 = vmatpush2.bf16.msra.mxu0 0
    %226 = vmatprep.mubr.bf16.mxu0 0
    %227 = vmatmul.mubr.bf16.gmra.mxu0 %v192
    %v228 = vpop.f32.mrf.mxu0
    %v229 = vadd.f32 %v176, %v228
    %v230 = vpop.f32.mrf.mxu0
    %v231 = vpop.f32.mrf.mxu0
    %v232 = vpop.f32.mrf.mxu0
    %233 = vdwg.mxu0
    %v234 = vpack.c.bf16 %v165, %v165
    %v235 = vld [vmem:[#allocation13] sm:$0xf]
    %v236 = vld [vmem:[#allocation13 + $0x4] sm:$0xf]
    %v237 = vld [vmem:[#allocation13 + $0x8] sm:$0xf]
    %v238 = vld [vmem:[#allocation13 + $0xc] sm:$0xf]
    %v239 = vld [vmem:[%s9] sm:$0x1]
    %v241 = vlaneseq
    %v242 = vshrl.u32 %v241, 7
    %v243 = vsub.s32 0, %v242
    %v244 = vrot.slane %v239, %v243
    %v250 = vunpack.c.l.b16 %v235
    %v251 = vunpack.c.l.b16 %v236
    %v252 = vunpack.c.l.b16 %v237
    %v253 = vunpack.c.l.b16 %v238
    %v254 = vpack.c.b16 %v251, %v250
    %v255 = vpack.c.b16 %v253, %v252
    %v259 = vsel %vm190, %v234, 0
    %261 = vmatprep.subr.bf16.mxu0 0
    %262 = vmatpush1.bf16.msra.mxu0 0
    %263 = vmatprep.subr.bf16.mxu0 0
    %264 = vmatpush1.bf16.msra.mxu0 0
    %265 = vmatprep.subr.bf16.mxu0 0
    %266 = vmatpush1.bf16.msra.mxu0 0
    %267 = vmatprep.subr.bf16.mxu0 0
    %268 = vmatpush1.bf16.msra.mxu0 0
    %269 = vmatprep.subr.bf16.mxu0 0
    %270 = vmatpush1.bf16.msra.mxu0 0
    %271 = vmatprep.subr.bf16.mxu0 0
    %272 = vmatpush1.bf16.msra.mxu0 0
    %273 = vmatprep.subr.bf16.mxu0 0
    %274 = vmatpush1.bf16.msra.mxu0 %v255
    %275 = vmatprep.subr.bf16.mxu0 0
    %276 = vmatpush1.bf16.msra.mxu0 %v254
    %277 = vmatprep.subr.bf16.mxu0 0
    %278 = vmatpush2.bf16.msra.mxu0 0
    %279 = vmatprep.subr.bf16.mxu0 0
    %280 = vmatpush2.bf16.msra.mxu0 0
    %281 = vmatprep.subr.bf16.mxu0 0
    %282 = vmatpush2.bf16.msra.mxu0 0
    %283 = vmatprep.subr.bf16.mxu0 0
    %284 = vmatpush2.bf16.msra.mxu0 0
    %285 = vmatprep.subr.bf16.mxu0 0
    %286 = vmatpush2.bf16.msra.mxu0 0
    %287 = vmatprep.subr.bf16.mxu0 0
    %288 = vmatpush2.bf16.msra.mxu0 0
    %289 = vmatprep.subr.bf16.mxu0 0
    %290 = vmatpush2.bf16.msra.mxu0 0
    %291 = vmatprep.subr.bf16.mxu0 0
    %292 = vmatpush2.bf16.msra.mxu0 0
    %293 = vmatprep.mubr.bf16.mxu0 0
    %294 = vmatmul.mubr.bf16.gmra.mxu0 %v259
    %v295 = vpop.f32.mrf.mxu0
    %v296 = vadd.f32 %v244, %v295
    %v297 = vpop.f32.mrf.mxu0
    %v298 = vpop.f32.mrf.mxu0
    %v299 = vpop.f32.mrf.mxu0
    %300 = vdwg.mxu0
    %v301 = vld [vmem:[%s3] sm:$0xf]
    %v302 = vunpack.c.l.bf16 %v301
    %v303 = vld [vmem:[#allocation8] sm:$0xf]
    %v304 = vunpack.c.l.bf16 %v303
    %v305 = vmul.f32 %v302, %v296
    %v306 = vsel %vm190, %v305, 0.0
    %307 = vadd.xlane.f32.xlu0 %v306
    %v308 = vpop.xlane.xlu0 %307
    %v309 = vmul.f32 %v308, 0.17677669
    %v310 = vmul.f32 %v304, %v229
    %v311 = vsel %vm190, %v310, 0.0
    %312 = vadd.xlane.f32.xlu0 %v311
    %v313 = vpop.xlane.xlu0 %312
    %v314 = vmul.f32 %v313, 0.17677669
    %316 = vrot.lane.b32.xlu0 %v296, 32
    %v317 = vpop.permute.xlu0 %316
    %v319 = vmul.f32 %v302, %v317
    %321 = vrot.lane.b32.xlu0 %v319, 96
    %v322 = vpop.permute.xlu0 %321
    %v324 = vsel %vm190, %v322, 0.0
    %325 = vadd.xlane.f32.xlu0 %v324
    %v326 = vpop.xlane.xlu0 %325
    %v327 = vmul.f32 %v326, 0.17677669
    %329 = vrot.lane.b32.xlu0 %v229, 32
    %v330 = vpop.permute.xlu0 %329
    %v332 = vmul.f32 %v304, %v330
    %334 = vrot.lane.b32.xlu0 %v332, 96
    %v335 = vpop.permute.xlu0 %334
    %v337 = vsel %vm190, %v335, 0.0
    %338 = vadd.xlane.f32.xlu0 %v337
    %v339 = vpop.xlane.xlu0 %338
    %v340 = vmul.f32 %v339, 0.17677669
    %341 = vrot.lane.b32.xlu0 %v296, 64
    %v342 = vpop.permute.xlu0 %341
    %v344 = vmul.f32 %v302, %v342
    %346 = vrot.lane.b32.xlu0 %v344, 64
    %v347 = vpop.permute.xlu0 %346
    %v349 = vsel %vm190, %v347, 0.0
    %350 = vadd.xlane.f32.xlu0 %v349
    %v351 = vpop.xlane.xlu0 %350
    %v352 = vmul.f32 %v351, 0.17677669
    %353 = vrot.lane.b32.xlu0 %v229, 64
    %v354 = vpop.permute.xlu0 %353
    %v356 = vmul.f32 %v304, %v354
    %358 = vrot.lane.b32.xlu0 %v356, 64
    %v359 = vpop.permute.xlu0 %358
    %v361 = vsel %vm190, %v359, 0.0
    %362 = vadd.xlane.f32.xlu0 %v361
    %v363 = vpop.xlane.xlu0 %362
    %v364 = vmul.f32 %v363, 0.17677669
    %365 = vrot.lane.b32.xlu0 %v296, 96
    %v366 = vpop.permute.xlu0 %365
    %v368 = vmul.f32 %v302, %v366
    %370 = vrot.lane.b32.xlu0 %v368, 32
    %v371 = vpop.permute.xlu0 %370
    %v373 = vsel %vm190, %v371, 0.0
    %374 = vadd.xlane.f32.xlu0 %v373
    %v375 = vpop.xlane.xlu0 %374
    %v376 = vmul.f32 %v375, 0.17677669
    %377 = vrot.lane.b32.xlu0 %v229, 96
    %v378 = vpop.permute.xlu0 %377
    %v380 = vmul.f32 %v304, %v378
    %382 = vrot.lane.b32.xlu0 %v380, 32
    %v383 = vpop.permute.xlu0 %382
    %v385 = vsel %vm190, %v383, 0.0
    %386 = vadd.xlane.f32.xlu0 %v385
    %v387 = vpop.xlane.xlu0 %386
    %v388 = vmul.f32 %v387, 0.17677669
    %v389 = vmax.f32 %v309, %v327
    %v390 = vmax.f32 %v389, %v352
    %v391 = vmax.f32 %v390, %v376
    %v392 = vsub.f32 %v309, %v391
    %v393 = vmul.f32 %v392, 1.442695
    %v394 = vpow.pop %v393
    %v395 = vsub.f32 %v327, %v391
    %v396 = vmul.f32 %v395, 1.442695
    %v397 = vpow.pop %v396
    %v398 = vsub.f32 %v352, %v391
    %v399 = vmul.f32 %v398, 1.442695
    %v400 = vpow.pop %v399
    %v401 = vsub.f32 %v376, %v391
    %v402 = vmul.f32 %v401, 1.442695
    %v403 = vpow.pop %v402
    %v404 = vadd.f32 %v394, %v397
    %v405 = vadd.f32 %v404, %v400
    %v406 = vadd.f32 %v405, %v403
    %v407 = vrcp.pop %v406
    %v408 = vmul.f32 1.0, %v407
    %v409 = vmul.f32 %v394, %v408
    %v410 = vmul.f32 %v397, %v408
    %v411 = vmul.f32 %v400, %v408
    %v412 = vmul.f32 %v403, %v408
    %v413 = vmax.f32 %v314, %v340
    %v414 = vmax.f32 %v413, %v364
    %v415 = vmax.f32 %v414, %v388
    %v416 = vsub.f32 %v314, %v415
    %v417 = vmul.f32 %v416, 1.442695
    %v418 = vpow.pop %v417
    %v419 = vsub.f32 %v340, %v415
    %v420 = vmul.f32 %v419, 1.442695
    %v421 = vpow.pop %v420
    %v422 = vsub.f32 %v364, %v415
    %v423 = vmul.f32 %v422, 1.442695
    %v424 = vpow.pop %v423
    %v425 = vsub.f32 %v388, %v415
    %v426 = vmul.f32 %v425, 1.442695
    %v427 = vpow.pop %v426
    %v428 = vadd.f32 %v418, %v421
    %v429 = vadd.f32 %v428, %v424
    %v430 = vadd.f32 %v429, %v427
    %v431 = vrcp.pop %v430
    %v432 = vmul.f32 1.0, %v431
    %v433 = vmul.f32 %v418, %v432
    %v434 = vmul.f32 %v421, %v432
    %v435 = vmul.f32 %v424, %v432
    %v436 = vmul.f32 %v427, %v432
    %v437 = vld [vmem:[#allocation7] sm:$0xf]
    %v438 = vunpack.c.l.bf16 %v437
    %v439 = vmul.f32 %v409, %v438
    %v440 = vld [vmem:[%s5] sm:$0xf]
    %v441 = vunpack.c.l.bf16 %v440
    %v442 = vmul.f32 %v433, %v441
    %v443 = vmul.f32 %v410, %v438
    %445 = vrot.lane.b32.xlu0 %v443, 96
    %v446 = vpop.permute.xlu0 %445
    %v448 = vadd.f32 %v439, %v446
    %v449 = vmul.f32 %v434, %v441
    %451 = vrot.lane.b32.xlu0 %v449, 96
    %v452 = vpop.permute.xlu0 %451
    %v454 = vadd.f32 %v442, %v452
    %v455 = vmul.f32 %v411, %v438
    %457 = vrot.lane.b32.xlu0 %v455, 64
    %v458 = vpop.permute.xlu0 %457
    %v460 = vadd.f32 %v448, %v458
    %v461 = vmul.f32 %v435, %v441
    %463 = vrot.lane.b32.xlu0 %v461, 64
    %v464 = vpop.permute.xlu0 %463
    %v466 = vadd.f32 %v454, %v464
    %v467 = vmul.f32 %v412, %v438
    %469 = vrot.lane.b32.xlu0 %v467, 32
    %v470 = vpop.permute.xlu0 %469
    %v472 = vadd.f32 %v460, %v470
    %v473 = vmul.f32 %v436, %v441
    %475 = vrot.lane.b32.xlu0 %v473, 32
    %v476 = vpop.permute.xlu0 %475
    %v478 = vadd.f32 %v466, %v476
    %v479 = vxor.u32 %v229, 2147483648
    %v480 = vmul.f32 %v479, 1.442695
    %v481 = vpow.pop %v480
    %v482 = vadd.f32 %v481, 1.0
    %v483 = vrcp.pop %v482
    %v484 = vmul.f32 1.0, %v483
    %v485 = vxor.u32 %v296, 2147483648
    %v486 = vmul.f32 %v485, 1.442695
    %v487 = vpow.pop %v486
    %v488 = vadd.f32 %v487, 1.0
    %v489 = vrcp.pop %v488
    %v490 = vmul.f32 1.0, %v489
    %v491 = vsub.f32 %v164, %v472
    %v492 = vmul.f32 %v484, %v491
    %v493 = vadd.f32 %v472, %v492
    %v494 = vsub.f32 %v165, %v478
    %v495 = vmul.f32 %v490, %v494
    %v496 = vadd.f32 %v478, %v495
    %v497 = vpack.c.bf16 %v493, %v493
    %v498 = vld [vmem:[#allocation14] sm:$0xff]
    %v499 = vld [vmem:[#allocation14 + $0x8] sm:$0xf]
    %v500 = vld [vmem:[#allocation14 + $0xc] sm:$0xff]
    %v501 = vld [vmem:[#allocation14 + $0x14] sm:$0xf]
    %v502 = vld [vmem:[#allocation14 + $0x18] sm:$0xff]
    %v503 = vld [vmem:[#allocation14 + $0x20] sm:$0xf]
    %v504 = vld [vmem:[#allocation14 + $0x24] sm:$0xff]
    %v505 = vld [vmem:[#allocation14 + $0x2c] sm:$0xf]
    %v506 = vld [vmem:[%s11] sm:$0x7]
    %v508 = vlaneseq
    %v509 = vshrl.u32 %v508, 7
    %v510 = vsub.s32 0, %v509
    %v511 = vrot.slane %v506, %v510
    %v512 = vlaneseq
    %v513 = vshrl.u32 %v512, 7
    %v514 = vsub.s32 1, %v513
    %v515 = vrot.slane %v506, %v514
    %v516 = vlaneseq
    %v517 = vshrl.u32 %v516, 7
    %v518 = vsub.s32 2, %v517
    %v519 = vrot.slane %v506, %v518
    %v531 = vunpack.c.l.b16 %v498
    %v532 = vunpack.c.h.b16 %v498
    %v533 = vunpack.c.l.b16 %v499
    %v534 = vunpack.c.l.b16 %v500
    %v535 = vunpack.c.h.b16 %v500
    %v536 = vunpack.c.l.b16 %v501
    %v537 = vunpack.c.l.b16 %v502
    %v538 = vunpack.c.h.b16 %v502
    %v539 = vunpack.c.l.b16 %v503
    %v540 = vunpack.c.l.b16 %v504
    %v541 = vunpack.c.h.b16 %v504
    %v542 = vunpack.c.l.b16 %v505
    %v543 = vpack.c.b16 %v534, %v531
    %v544 = vpack.c.b16 %v535, %v532
    %v545 = vpack.c.b16 %v536, %v533
    %v546 = vpack.c.b16 %v540, %v537
    %v547 = vpack.c.b16 %v541, %v538
    %v548 = vpack.c.b16 %v542, %v539
    %v556 = vsel %vm190, %v497, 0
    %558 = vmatprep.subr.bf16.mxu0 0
    %559 = vmatpush1.bf16.msra.mxu0 0
    %560 = vmatprep.subr.bf16.mxu0 0
    %561 = vmatpush1.bf16.msra.mxu0 0
    %562 = vmatprep.subr.bf16.mxu0 0
    %563 = vmatpush1.bf16.msra.mxu0 0
    %564 = vmatprep.subr.bf16.mxu0 0
    %565 = vmatpush1.bf16.msra.mxu0 0
    %566 = vmatprep.subr.bf16.mxu0 0
    %567 = vmatpush1.bf16.msra.mxu0 0
    %568 = vmatprep.subr.bf16.mxu0 0
    %569 = vmatpush1.bf16.msra.mxu0 0
    %570 = vmatprep.subr.bf16.mxu0 %v547
    %571 = vmatpush1.bf16.msra.mxu0 %v546
    %572 = vmatprep.subr.bf16.mxu0 %v544
    %573 = vmatpush1.bf16.msra.mxu0 %v543
    %574 = vmatprep.subr.bf16.mxu0 0
    %575 = vmatpush2.bf16.msra.mxu0 0
    %576 = vmatprep.subr.bf16.mxu0 0
    %577 = vmatpush2.bf16.msra.mxu0 0
    %578 = vmatprep.subr.bf16.mxu0 0
    %579 = vmatpush2.bf16.msra.mxu0 0
    %580 = vmatprep.subr.bf16.mxu0 0
    %581 = vmatpush2.bf16.msra.mxu0 0
    %582 = vmatprep.subr.bf16.mxu0 0
    %583 = vmatpush2.bf16.msra.mxu0 0
    %584 = vmatprep.subr.bf16.mxu0 0
    %585 = vmatpush2.bf16.msra.mxu0 0
    %586 = vmatprep.subr.bf16.mxu0 0
    %587 = vmatpush2.bf16.msra.mxu0 0
    %588 = vmatprep.subr.bf16.mxu0 0
    %589 = vmatpush2.bf16.msra.mxu0 0
    %590 = vmatprep.mubr.bf16.mxu0 0
    %591 = vmatmul.mubr.bf16.gmra.mxu0 %v556
    %v592 = vpop.f32.mrf.mxu0
    %v593 = vadd.f32 %v511, %v592
    %v594 = vpop.f32.mrf.mxu0
    %v595 = vadd.f32 %v515, %v594
    %v596 = vpop.f32.mrf.mxu0
    %v597 = vpop.f32.mrf.mxu0
    %598 = vdwg.mxu0
    %599 = vmatprep.subr.bf16.mxu0 0
    %600 = vmatpush1.bf16.msra.mxu0 0
    %601 = vmatprep.subr.bf16.mxu0 0
    %602 = vmatpush1.bf16.msra.mxu0 0
    %603 = vmatprep.subr.bf16.mxu0 0
    %604 = vmatpush1.bf16.msra.mxu0 0
    %605 = vmatprep.subr.bf16.mxu0 0
    %606 = vmatpush1.bf16.msra.mxu0 0
    %607 = vmatprep.subr.bf16.mxu0 0
    %608 = vmatpush1.bf16.msra.mxu0 0
    %609 = vmatprep.subr.bf16.mxu0 0
    %610 = vmatpush1.bf16.msra.mxu0 0
    %611 = vmatprep.subr.bf16.mxu0 0
    %612 = vmatpush1.bf16.msra.mxu0 %v548
    %613 = vmatprep.subr.bf16.mxu0 0
    %614 = vmatpush1.bf16.msra.mxu0 %v545
    %615 = vmatprep.subr.bf16.mxu0 0
    %616 = vmatpush2.bf16.msra.mxu0 0
    %617 = vmatprep.subr.bf16.mxu0 0
    %618 = vmatpush2.bf16.msra.mxu0 0
    %619 = vmatprep.subr.bf16.mxu0 0
    %620 = vmatpush2.bf16.msra.mxu0 0
    %621 = vmatprep.subr.bf16.mxu0 0
    %622 = vmatpush2.bf16.msra.mxu0 0
    %623 = vmatprep.subr.bf16.mxu0 0
    %624 = vmatpush2.bf16.msra.mxu0 0
    %625 = vmatprep.subr.bf16.mxu0 0
    %626 = vmatpush2.bf16.msra.mxu0 0
    %627 = vmatprep.subr.bf16.mxu0 0
    %628 = vmatpush2.bf16.msra.mxu0 0
    %629 = vmatprep.subr.bf16.mxu0 0
    %630 = vmatpush2.bf16.msra.mxu0 0
    %631 = vmatprep.mubr.bf16.mxu0 0
    %632 = vmatmul.mubr.bf16.gmra.mxu0 %v556
    %v633 = vpop.f32.mrf.mxu0
    %v634 = vadd.f32 %v519, %v633
    %v635 = vpop.f32.mrf.mxu0
    %v636 = vpop.f32.mrf.mxu0
    %v637 = vpop.f32.mrf.mxu0
    %638 = vdwg.mxu0
    %v639 = vpack.c.bf16 %v496, %v496
    %v640 = vld [vmem:[#allocation16] sm:$0xff]
    %v641 = vld [vmem:[#allocation16 + $0x8] sm:$0xf]
    %v642 = vld [vmem:[#allocation16 + $0xc] sm:$0xff]
    %v643 = vld [vmem:[#allocation16 + $0x14] sm:$0xf]
    %v644 = vld [vmem:[#allocation16 + $0x18] sm:$0xff]
    %v645 = vld [vmem:[#allocation16 + $0x20] sm:$0xf]
    %v646 = vld [vmem:[#allocation16 + $0x24] sm:$0xff]
    %v647 = vld [vmem:[#allocation16 + $0x2c] sm:$0xf]
    %v648 = vld [vmem:[%s13] sm:$0x7]
    %v650 = vlaneseq
    %v651 = vshrl.u32 %v650, 7
    %v652 = vsub.s32 0, %v651
    %v653 = vrot.slane %v648, %v652
    %v654 = vlaneseq
    %v655 = vshrl.u32 %v654, 7
    %v656 = vsub.s32 1, %v655
    %v657 = vrot.slane %v648, %v656
    %v658 = vlaneseq
    %v659 = vshrl.u32 %v658, 7
    %v660 = vsub.s32 2, %v659
    %v661 = vrot.slane %v648, %v660
    %v673 = vunpack.c.l.b16 %v640
    %v674 = vunpack.c.h.b16 %v640
    %v675 = vunpack.c.l.b16 %v641
    %v676 = vunpack.c.l.b16 %v642
    %v677 = vunpack.c.h.b16 %v642
    %v678 = vunpack.c.l.b16 %v643
    %v679 = vunpack.c.l.b16 %v644
    %v680 = vunpack.c.h.b16 %v644
    %v681 = vunpack.c.l.b16 %v645
    %v682 = vunpack.c.l.b16 %v646
    %v683 = vunpack.c.h.b16 %v646
    %v684 = vunpack.c.l.b16 %v647
    %v685 = vpack.c.b16 %v676, %v673
    %v686 = vpack.c.b16 %v677, %v674
    %v687 = vpack.c.b16 %v678, %v675
    %v688 = vpack.c.b16 %v682, %v679
    %v689 = vpack.c.b16 %v683, %v680
    %v690 = vpack.c.b16 %v684, %v681
    %v698 = vsel %vm190, %v639, 0
    %700 = vmatprep.subr.bf16.mxu0 0
    %701 = vmatpush1.bf16.msra.mxu0 0
    %702 = vmatprep.subr.bf16.mxu0 0
    %703 = vmatpush1.bf16.msra.mxu0 0
    %704 = vmatprep.subr.bf16.mxu0 0
    %705 = vmatpush1.bf16.msra.mxu0 0
    %706 = vmatprep.subr.bf16.mxu0 0
    %707 = vmatpush1.bf16.msra.mxu0 0
    %708 = vmatprep.subr.bf16.mxu0 0
    %709 = vmatpush1.bf16.msra.mxu0 0
    %710 = vmatprep.subr.bf16.mxu0 0
    %711 = vmatpush1.bf16.msra.mxu0 0
    %712 = vmatprep.subr.bf16.mxu0 %v689
    %713 = vmatpush1.bf16.msra.mxu0 %v688
    %714 = vmatprep.subr.bf16.mxu0 %v686
    %715 = vmatpush1.bf16.msra.mxu0 %v685
    %716 = vmatprep.subr.bf16.mxu0 0
    %717 = vmatpush2.bf16.msra.mxu0 0
    %718 = vmatprep.subr.bf16.mxu0 0
    %719 = vmatpush2.bf16.msra.mxu0 0
    %720 = vmatprep.subr.bf16.mxu0 0
    %721 = vmatpush2.bf16.msra.mxu0 0
    %722 = vmatprep.subr.bf16.mxu0 0
    %723 = vmatpush2.bf16.msra.mxu0 0
    %724 = vmatprep.subr.bf16.mxu0 0
    %725 = vmatpush2.bf16.msra.mxu0 0
    %726 = vmatprep.subr.bf16.mxu0 0
    %727 = vmatpush2.bf16.msra.mxu0 0
    %728 = vmatprep.subr.bf16.mxu0 0
    %729 = vmatpush2.bf16.msra.mxu0 0
    %730 = vmatprep.subr.bf16.mxu0 0
    %731 = vmatpush2.bf16.msra.mxu0 0
    %732 = vmatprep.mubr.bf16.mxu0 0
    %733 = vmatmul.mubr.bf16.gmra.mxu0 %v698
    %v734 = vpop.f32.mrf.mxu0
    %v735 = vadd.f32 %v653, %v734
    %v736 = vpop.f32.mrf.mxu0
    %v737 = vadd.f32 %v657, %v736
    %v738 = vpop.f32.mrf.mxu0
    %v739 = vpop.f32.mrf.mxu0
    %740 = vdwg.mxu0
    %741 = vmatprep.subr.bf16.mxu0 0
    %742 = vmatpush1.bf16.msra.mxu0 0
    %743 = vmatprep.subr.bf16.mxu0 0
    %744 = vmatpush1.bf16.msra.mxu0 0
    %745 = vmatprep.subr.bf16.mxu0 0
    %746 = vmatpush1.bf16.msra.mxu0 0
    %747 = vmatprep.subr.bf16.mxu0 0
    %748 = vmatpush1.bf16.msra.mxu0 0
    %749 = vmatprep.subr.bf16.mxu0 0
    %750 = vmatpush1.bf16.msra.mxu0 0
    %751 = vmatprep.subr.bf16.mxu0 0
    %752 = vmatpush1.bf16.msra.mxu0 0
    %753 = vmatprep.subr.bf16.mxu0 0
    %754 = vmatpush1.bf16.msra.mxu0 %v690
    %755 = vmatprep.subr.bf16.mxu0 0
    %756 = vmatpush1.bf16.msra.mxu0 %v687
    %757 = vmatprep.subr.bf16.mxu0 0
    %758 = vmatpush2.bf16.msra.mxu0 0
    %759 = vmatprep.subr.bf16.mxu0 0
    %760 = vmatpush2.bf16.msra.mxu0 0
    %761 = vmatprep.subr.bf16.mxu0 0
    %762 = vmatpush2.bf16.msra.mxu0 0
    %763 = vmatprep.subr.bf16.mxu0 0
    %764 = vmatpush2.bf16.msra.mxu0 0
    %765 = vmatprep.subr.bf16.mxu0 0
    %766 = vmatpush2.bf16.msra.mxu0 0
    %767 = vmatprep.subr.bf16.mxu0 0
    %768 = vmatpush2.bf16.msra.mxu0 0
    %769 = vmatprep.subr.bf16.mxu0 0
    %770 = vmatpush2.bf16.msra.mxu0 0
    %771 = vmatprep.subr.bf16.mxu0 0
    %772 = vmatpush2.bf16.msra.mxu0 0
    %773 = vmatprep.mubr.bf16.mxu0 0
    %774 = vmatmul.mubr.bf16.gmra.mxu0 %v698
    %v775 = vpop.f32.mrf.mxu0
    %v776 = vadd.f32 %v661, %v775
    %v777 = vpop.f32.mrf.mxu0
    %v778 = vpop.f32.mrf.mxu0
    %v779 = vpop.f32.mrf.mxu0
    %780 = vdwg.mxu0
    %v781 = vxor.u32 %v593, 2147483648
    %v782 = vmul.f32 %v781, 1.442695
    %v783 = vpow.pop %v782
    %v784 = vadd.f32 %v783, 1.0
    %v785 = vrcp.pop %v784
    %v786 = vmul.f32 1.0, %v785
    %v787 = vxor.u32 %v735, 2147483648
    %v788 = vmul.f32 %v787, 1.442695
    %v789 = vpow.pop %v788
    %v790 = vadd.f32 %v789, 1.0
    %v791 = vrcp.pop %v790
    %v792 = vmul.f32 1.0, %v791
    %v793 = vsub.f32 %v595, %v737
    %v794 = vmul.f32 %v786, %v793
    %v795 = vadd.f32 %v737, %v794
    %v796 = vsub.f32 %v776, %v634
    %v797 = vmul.f32 %v792, %v796
    %v798 = vadd.f32 %v634, %v797
    %799 = vst.msk [vmem:[#allocation17] sm:$0xff] %vm190, %v795
    %800 = vst.msk [vmem:[#allocation18] sm:$0xff] %vm190, %v798
    // Predicated region
    $region94: #{tpu_custom_call.1} parent=1 // pred_check
      _
    $region95: #{tpu_custom_call.1} parent=1 // pred_check_branch
      %802 = sbr.rel (0) target = $region97
    $region96: #{tpu_custom_call.1} parent=1 // pred_region
      %s804 = ssub.s32 128, 128
      %805 = vsyncadd [#allocation4], %s804
      %s807 = sshll.u32 [#allocation17], 4
      %s808 = int_to_ptr.vmem [resolvable:$true] %s807
      %810 = dma.vmem_to_hbm [thread:$0]  %s808, 128, %s14, [#allocation4]
    $region97: #{tpu_custom_call.1} parent=1 // pred_fallthru
      _
    // Predicated region
    $region98: #{tpu_custom_call.1} parent=1 // pred_check
      _
    $region99: #{tpu_custom_call.1} parent=1 // pred_check_branch
      %812 = sbr.rel (0) target = $region101
    $region100: #{tpu_custom_call.1} parent=1 // pred_region
      %s814 = ssub.s32 128, 128
      %815 = vsyncadd [#allocation19], %s814
      %s817 = sshll.u32 [#allocation18], 4
      %s818 = int_to_ptr.vmem [resolvable:$true] %s817
      %820 = dma.vmem_to_hbm [thread:$0]  %s818, 128, %s15, [#allocation19]
    $region101: #{tpu_custom_call.1} parent=1 // pred_fallthru
      _
    // Predicated region
    $region102: #{tpu_custom_call.1} parent=1 // pred_check
      _
    $region103: #{tpu_custom_call.1} parent=1 // pred_check_branch
      %822 = sbr.rel (0) target = $region105
    $region104: #{tpu_custom_call.1} parent=1 // pred_region
      %823 = dma.done [#allocation4], 128
    $region105: #{tpu_custom_call.1} parent=1 // pred_fallthru
      _
    // Predicated region
    $region106: #{tpu_custom_call.1} parent=1 // pred_check
      _
    $region107: #{tpu_custom_call.1} parent=1 // pred_check_branch
      %825 = sbr.rel (0) target = $region109
    $region108: #{tpu_custom_call.1} parent=1 // pred_region
      %826 = dma.done [#allocation19], 128
    $region109: #{tpu_custom_call.1} parent=1 // pred_fallthru
      _
    %827 = vsyncpa [#allocation3], 1
    %828 = vsyncpa [#allocation6], 1
    %829 = vsyncpa [#allocation9], 1
    %830 = vsyncpa [#allocation12], 1
    %831 = vsyncpa [#allocation15], 1
    %832 = vsyncpa [#allocation4], 1
    %833 = vsyncpa [#allocation19], 1

// kernel: tpu_custom_call.1
$region0: #{tpu_custom_call.1}
  #allocation0 [shape = 'u32[]', space=smem, size = 0x4, offset = 0x4, fixed_abs, tag = 'smem constant byte address 0x4 - core index']
  #allocation1 [shape = 'u32[144,128]{1,0:T(1,128)}', space=vmem, size = 0x12000, scoped, tag = 'internal scratch']
  %s0 = inlined_call_operand.hbm [shape: f32[8,32], index: 0, kind: input, shape index: {}]
  %s1 = inlined_call_operand.hbm [shape: f32[8,32], index: 1, kind: input, shape index: {}]
  %s2 = inlined_call_operand.hbm [shape: bf16[8,128], index: 2, kind: input, shape index: {}]
  %s3 = inlined_call_operand.vmem [shape: bf16[8,128], index: 3, kind: input, shape index: {}]
  %s4 = inlined_call_operand.hbm [shape: bf16[8,128], index: 4, kind: input, shape index: {}]
  %s5 = inlined_call_operand.vmem [shape: bf16[8,128], index: 5, kind: input, shape index: {}]
  %s6 = inlined_call_operand.hbm [shape: bf16[32,32], index: 6, kind: input, shape index: {}]
  %s7 = inlined_call_operand.hbm [shape: f32[1,32], index: 7, kind: input, shape index: {}]
  %s8 = inlined_call_operand.hbm [shape: bf16[32,32], index: 8, kind: input, shape index: {}]
  %s9 = inlined_call_operand.vmem [shape: f32[1,32], index: 9, kind: input, shape index: {}]
  %s10 = inlined_call_operand.hbm [shape: bf16[32,384], index: 10, kind: input, shape index: {}]
  %s11 = inlined_call_operand.vmem [shape: f32[1,384], index: 11, kind: input, shape index: {}]
  %s12 = inlined_call_operand.hbm [shape: bf16[32,384], index: 12, kind: input, shape index: {}]
  %s13 = inlined_call_operand.vmem [shape: f32[1,384], index: 13, kind: input, shape index: {}]
  %s14 = inlined_call_operand.hbm [shape: f32[8,32], index: 14, kind: output, shape index: {0}]
  %s15 = inlined_call_operand.hbm [shape: f32[8,32], index: 15, kind: output, shape index: {1}]
  %16 = xla_tuple %s14, %s15
  %s17 = sld [smem:[#allocation0]]
  $region110: #{tpu_custom_call.1} parent=0
    _
  %s19 = ssub.s32 1, %s17
  %s20 = scalar_select 0, %s19, %s17
  $region1: #{tpu_custom_call.1} parent=0
    #allocation2 [shape = 'u8[4096]{0}', space=vmem, size = 0x1000, scoped, tag = 'input window, operand 0, single buffered']
    #allocation3 [shape = 's32[1]{0}', space=sflag, size = 0x4, scoped, tag = 'scoped memory for tpu_custom_call.1']
    #allocation4 [shape = 's32[1]{0}', space=sflag, size = 0x4, scoped, tag = 'scoped memory for tpu_custom_call.1']
    #allocation5 [shape = 'u8[4096]{0}', space=vmem, size = 0x1000, scoped, tag = 'input window, operand 1, single buffered']
    #allocation6 [shape = 's32[1]{0}', space=sflag, size = 0x4, scoped, tag = 'scoped memory for tpu_custom_call.1']
    #allocation7 [shape = 'u8[2048]{0}', space=vmem, size = 0x800, scoped, tag = 'input window, operand 2, single buffered']
    #allocation8 [shape = 'u8[2048]{0}', space=vmem, size = 0x800, scoped, tag = 'input window, operand 4, single buffered']
    #allocation9 [shape = 's32[1]{0}', space=sflag, size = 0x4, scoped, tag = 'scoped memory for tpu_custom_call.1']
    #allocation10 [shape = 'u8[8192]{0}', space=vmem, size = 0x2000, scoped, tag = 'input window, operand 6, single buffered']
    #allocation11 [shape = 'u8[512]{0}', space=vmem, size = 0x400, scoped, tag = 'input window, operand 7, single buffered']
    #allocation12 [shape = 's32[1]{0}', space=sflag, size = 0x4, scoped, tag = 'scoped memory for tpu_custom_call.1']
    #allocation13 [shape = 'u8[8192]{0}', space=vmem, size = 0x2000, scoped, tag = 'input window, operand 8, single buffered']
    #allocation14 [shape = 'u8[24576]{0}', space=vmem, size = 0x6000, scoped, tag = 'input window, operand 10, single buffered']
    #allocation15 [shape = 's32[1]{0}', space=sflag, size = 0x4, scoped, tag = 'scoped memory for tpu_custom_call.1']
    #allocation16 [shape = 'u8[24576]{0}', space=vmem, size = 0x6000, scoped, tag = 'input window, operand 12, single buffered']
    #allocation17 [shape = 'u8[4096]{0}', space=vmem, size = 0x1000, scoped, tag = 'output window, operand 0, single buffered']
    #allocation18 [shape = 'u8[4096]{0}', space=vmem, size = 0x1000, scoped, tag = 'output window, operand 1, single buffered']
    #allocation19 [shape = 's32[1]{0}', space=sflag, size = 0x4, scoped, tag = 'scoped memory for tpu_custom_call.1']
    %21 = vsyncpa [#allocation3], 0
    %22 = vsyncpa [#allocation6], 0
    %23 = vsyncpa [#allocation9], 0
    %24 = vsyncpa [#allocation12], 0
    %25 = vsyncpa [#allocation15], 0
    %26 = vsyncpa [#allocation4], 0
    %27 = vsyncpa [#allocation19], 0
    // Predicated region
    $region2: #{tpu_custom_call.1} parent=1 // pred_check
      _
    $region3: #{tpu_custom_call.1} parent=1 // pred_check_branch
      %29 = sbr.rel (0) target = $region5
    $region4: #{tpu_custom_call.1} parent=1 // pred_region
      %s31 = ssub.s32 128, 128
      %32 = vsyncadd [#allocation3], %s31
      %s34 = sshll.u32 [#allocation2], 4
      %s35 = int_to_ptr.vmem [resolvable:$true] %s34
      %37 = dma.hbm_to_vmem [thread:$0]  %s0, 128, %s35, [#allocation3]
    $region5: #{tpu_custom_call.1} parent=1 // pred_fallthru
      _
    // Predicated region
    $region6: #{tpu_custom_call.1} parent=1 // pred_check
      _
    $region7: #{tpu_custom_call.1} parent=1 // pred_check_branch
      %39 = sbr.rel (0) target = $region9
    $region8: #{tpu_custom_call.1} parent=1 // pred_region
      %s41 = ssub.s32 128, 128
      %42 = vsyncadd [#allocation6], %s41
      %s44 = sshll.u32 [#allocation5], 4
      %s45 = int_to_ptr.vmem [resolvable:$true] %s44
      %47 = dma.hbm_to_vmem [thread:$0]  %s1, 128, %s45, [#allocation6]
    $region9: #{tpu_custom_call.1} parent=1 // pred_fallthru
      _
    // Predicated region
    $region10: #{tpu_custom_call.1} parent=1 // pred_check
      _
    $region11: #{tpu_custom_call.1} parent=1 // pred_check_branch
      %49 = sbr.rel (0) target = $region13
    $region12: #{tpu_custom_call.1} parent=1 // pred_region
      %s51 = ssub.s32 64, 64
      %52 = vsyncadd [#allocation6], %s51
      %s54 = sshll.u32 [#allocation7], 4
      %s55 = int_to_ptr.vmem [resolvable:$true] %s54
      %57 = dma.hbm_to_vmem [thread:$0]  %s2, 64, %s55, [#allocation6]
    $region13: #{tpu_custom_call.1} parent=1 // pred_fallthru
      _
    // Predicated region
    $region14: #{tpu_custom_call.1} parent=1 // pred_check
      _
    $region15: #{tpu_custom_call.1} parent=1 // pred_check_branch
      %59 = sbr.rel (0) target = $region17
    $region16: #{tpu_custom_call.1} parent=1 // pred_region
      _
    $region17: #{tpu_custom_call.1} parent=1 // pred_fallthru
      _
    // Predicated region
    $region18: #{tpu_custom_call.1} parent=1 // pred_check
      _
    $region19: #{tpu_custom_call.1} parent=1 // pred_check_branch
      %61 = sbr.rel (0) target = $region21
    $region20: #{tpu_custom_call.1} parent=1 // pred_region
      %s63 = ssub.s32 64, 64
      %64 = vsyncadd [#allocation9], %s63
      %s66 = sshll.u32 [#allocation8], 4
      %s67 = int_to_ptr.vmem [resolvable:$true] %s66
      %69 = dma.hbm_to_vmem [thread:$0]  %s4, 64, %s67, [#allocation9]
    $region21: #{tpu_custom_call.1} parent=1 // pred_fallthru
      _
    // Predicated region
    $region22: #{tpu_custom_call.1} parent=1 // pred_check
      _
    $region23: #{tpu_custom_call.1} parent=1 // pred_check_branch
      %71 = sbr.rel (0) target = $region25
    $region24: #{tpu_custom_call.1} parent=1 // pred_region
      _
    $region25: #{tpu_custom_call.1} parent=1 // pred_fallthru
      _
    // Predicated region
    $region26: #{tpu_custom_call.1} parent=1 // pred_check
      _
    $region27: #{tpu_custom_call.1} parent=1 // pred_check_branch
      %73 = sbr.rel (0) target = $region29
    $region28: #{tpu_custom_call.1} parent=1 // pred_region
      %s75 = ssub.s32 256, 256
      %76 = vsyncadd [#allocation9], %s75
      %s77 = sshll.u32 [#allocation10], 4
      %s78 = int_to_ptr.vmem [resolvable:$true] %s77
      %83 = dma.hbm_to_vmem [thread:$0]  %s6, 256, %s78, [#allocation9], 64, 64, 4
    $region29: #{tpu_custom_call.1} parent=1 // pred_fallthru
      _
    // Predicated region
    $region30: #{tpu_custom_call.1} parent=1 // pred_check
      _
    $region31: #{tpu_custom_call.1} parent=1 // pred_check_branch
      %85 = sbr.rel (0) target = $region33
    $region32: #{tpu_custom_call.1} parent=1 // pred_region
      %s87 = ssub.s32 16, 16
      %88 = vsyncadd [#allocation12], %s87
      %s90 = sshll.u32 [#allocation11], 4
      %s91 = int_to_ptr.vmem [resolvable:$true] %s90
      %93 = dma.hbm_to_vmem [thread:$0]  %s7, 16, %s91, [#allocation12]
    $region33: #{tpu_custom_call.1} parent=1 // pred_fallthru
      _
    // Predicated region
    $region34: #{tpu_custom_call.1} parent=1 // pred_check
      _
    $region35: #{tpu_custom_call.1} parent=1 // pred_check_branch
      %95 = sbr.rel (0) target = $region37
    $region36: #{tpu_custom_call.1} parent=1 // pred_region
      %s97 = ssub.s32 256, 256
      %98 = vsyncadd [#allocation12], %s97
      %s99 = sshll.u32 [#allocation13], 4
      %s100 = int_to_ptr.vmem [resolvable:$true] %s99
      %105 = dma.hbm_to_vmem [thread:$0]  %s8, 256, %s100, [#allocation12], 64, 64, 4
    $region37: #{tpu_custom_call.1} parent=1 // pred_fallthru
      _
    // Predicated region
    $region38: #{tpu_custom_call.1} parent=1 // pred_check
      _
    $region39: #{tpu_custom_call.1} parent=1 // pred_check_branch
      %107 = sbr.rel (0) target = $region41
    $region40: #{tpu_custom_call.1} parent=1 // pred_region
      _
    $region41: #{tpu_custom_call.1} parent=1 // pred_fallthru
      _
    // Predicated region
    $region42: #{tpu_custom_call.1} parent=1 // pred_check
      _
    $region43: #{tpu_custom_call.1} parent=1 // pred_check_branch
      %109 = sbr.rel (0) target = $region45
    $region44: #{tpu_custom_call.1} parent=1 // pred_region
      %s111 = ssub.s32 768, 768
      %112 = vsyncadd [#allocation15], %s111
      %s113 = sshll.u32 [#allocation14], 4
      %s114 = int_to_ptr.vmem [resolvable:$true] %s113
      %119 = dma.hbm_to_vmem [thread:$0]  %s10, 768, %s114, [#allocation15], 192, 192, 12
    $region45: #{tpu_custom_call.1} parent=1 // pred_fallthru
      _
    // Predicated region
    $region46: #{tpu_custom_call.1} parent=1 // pred_check
      _
    $region47: #{tpu_custom_call.1} parent=1 // pred_check_branch
      %121 = sbr.rel (0) target = $region49
    $region48: #{tpu_custom_call.1} parent=1 // pred_region
      _
    $region49: #{tpu_custom_call.1} parent=1 // pred_fallthru
      _
    // Predicated region
    $region50: #{tpu_custom_call.1} parent=1 // pred_check
      _
    $region51: #{tpu_custom_call.1} parent=1 // pred_check_branch
      %123 = sbr.rel (0) target = $region53
    $region52: #{tpu_custom_call.1} parent=1 // pred_region
      %s125 = ssub.s32 768, 768
      %126 = vsyncadd [#allocation15], %s125
      %s127 = sshll.u32 [#allocation16], 4
      %s128 = int_to_ptr.vmem [resolvable:$true] %s127
      %133 = dma.hbm_to_vmem [thread:$0]  %s12, 768, %s128, [#allocation15], 192, 192, 12
    $region53: #{tpu_custom_call.1} parent=1 // pred_fallthru
      _
    // Predicated region
    $region54: #{tpu_custom_call.1} parent=1 // pred_check
      _
    $region55: #{tpu_custom_call.1} parent=1 // pred_check_branch
      %135 = sbr.rel (0) target = $region57
    $region56: #{tpu_custom_call.1} parent=1 // pred_region
      _
    $region57: #{tpu_custom_call.1} parent=1 // pred_fallthru
      _
    // Predicated region
    $region58: #{tpu_custom_call.1} parent=1 // pred_check
      _
    $region59: #{tpu_custom_call.1} parent=1 // pred_check_branch
      %137 = sbr.rel (0) target = $region61
    $region60: #{tpu_custom_call.1} parent=1 // pred_region
      %138 = dma.done [#allocation3], 128
    $region61: #{tpu_custom_call.1} parent=1 // pred_fallthru
      _
    // Predicated region
    $region62: #{tpu_custom_call.1} parent=1 // pred_check
      _
    $region63: #{tpu_custom_call.1} parent=1 // pred_check_branch
      %140 = sbr.rel (0) target = $region65
    $region64: #{tpu_custom_call.1} parent=1 // pred_region
      %141 = dma.done [#allocation6], 128
    $region65: #{tpu_custom_call.1} parent=1 // pred_fallthru
      _
    // Predicated region
    $region66: #{tpu_custom_call.1} parent=1 // pred_check
      _
    $region67: #{tpu_custom_call.1} parent=1 // pred_check_branch
      %143 = sbr.rel (0) target = $region69
    $region68: #{tpu_custom_call.1} parent=1 // pred_region
      %144 = dma.done [#allocation6], 64
    $region69: #{tpu_custom_call.1} parent=1 // pred_fallthru
      _
    // Predicated region
    $region70: #{tpu_custom_call.1} parent=1 // pred_check
      _
    $region71: #{tpu_custom_call.1} parent=1 // pred_check_branch
      %146 = sbr.rel (0) target = $region73
    $region72: #{tpu_custom_call.1} parent=1 // pred_region
      %147 = dma.done [#allocation9], 64
    $region73: #{tpu_custom_call.1} parent=1 // pred_fallthru
      _
    // Predicated region
    $region74: #{tpu_custom_call.1} parent=1 // pred_check
      _
    $region75: #{tpu_custom_call.1} parent=1 // pred_check_branch
      %149 = sbr.rel (0) target = $region77
    $region76: #{tpu_custom_call.1} parent=1 // pred_region
      %150 = dma.done [#allocation9], 256
    $region77: #{tpu_custom_call.1} parent=1 // pred_fallthru
      _
    // Predicated region
    $region78: #{tpu_custom_call.1} parent=1 // pred_check
      _
    $region79: #{tpu_custom_call.1} parent=1 // pred_check_branch
      %152 = sbr.rel (0) target = $region81
    $region80: #{tpu_custom_call.1} parent=1 // pred_region
      %153 = dma.done [#allocation12], 16
    $region81: #{tpu_custom_call.1} parent=1 // pred_fallthru
      _
    // Predicated region
    $region82: #{tpu_custom_call.1} parent=1 // pred_check
      _
    $region83: #{tpu_custom_call.1} parent=1 // pred_check_branch
      %155 = sbr.rel (0) target = $region85
    $region84: #{tpu_custom_call.1} parent=1 // pred_region
      %156 = dma.done [#allocation12], 256
    $region85: #{tpu_custom_call.1} parent=1 // pred_fallthru
      _
    // Predicated region
    $region86: #{tpu_custom_call.1} parent=1 // pred_check
      _
    $region87: #{tpu_custom_call.1} parent=1 // pred_check_branch
      %158 = sbr.rel (0) target = $region89
    $region88: #{tpu_custom_call.1} parent=1 // pred_region
      %159 = dma.done [#allocation15], 768
    $region89: #{tpu_custom_call.1} parent=1 // pred_fallthru
      _
    // Predicated region
    $region90: #{tpu_custom_call.1} parent=1 // pred_check
      _
    $region91: #{tpu_custom_call.1} parent=1 // pred_check_branch
      %161 = sbr.rel (0) target = $region93
    $region92: #{tpu_custom_call.1} parent=1 // pred_region
      %162 = dma.done [#allocation15], 768
    $region93: #{tpu_custom_call.1} parent=1 // pred_fallthru
      _
    %v164 = vld [vmem:[#allocation2] sm:$0xff]
    %v165 = vld [vmem:[#allocation5] sm:$0xff]
    %v166 = vpack.c.bf16 %v164, %v164
    %v167 = vld [vmem:[#allocation10] sm:$0xf]
    %v168 = vld [vmem:[#allocation10 + $0x4] sm:$0xf]
    %v169 = vld [vmem:[#allocation10 + $0x8] sm:$0xf]
    %v170 = vld [vmem:[#allocation10 + $0xc] sm:$0xf]
    %v171 = vld [vmem:[#allocation11] sm:$0x1]
    %v173 = vlaneseq
    %v174 = vshrl.u32 %v173, 7
    %v175 = vsub.s32 0, %v174
    %v176 = vrot.slane %v171, %v175
    %v182 = vunpack.c.l.b16 %v167
    %v183 = vunpack.c.l.b16 %v168
    %v184 = vunpack.c.l.b16 %v169
    %v185 = vunpack.c.l.b16 %v170
    %v186 = vpack.c.b16 %v183, %v182
    %v187 = vpack.c.b16 %v185, %v184
    %vm190 = vcmask 261120
    %v192 = vsel %vm190, %v166, 0
    %194 = vmatprep.subr.bf16.mxu0 0
    %195 = vmatpush1.bf16.msra.mxu0 0
    %196 = vmatprep.subr.bf16.mxu0 0
    %197 = vmatpush1.bf16.msra.mxu0 0
    %198 = vmatprep.subr.bf16.mxu0 0
    %199 = vmatpush1.bf16.msra.mxu0 0
    %200 = vmatprep.subr.bf16.mxu0 0
    %201 = vmatpush1.bf16.msra.mxu0 0
    %202 = vmatprep.subr.bf16.mxu0 0
    %203 = vmatpush1.bf16.msra.mxu0 0
    %204 = vmatprep.subr.bf16.mxu0 0
    %205 = vmatpush1.bf16.msra.mxu0 0
    %206 = vmatprep.subr.bf16.mxu0 0
    %207 = vmatpush1.bf16.msra.mxu0 %v187
    %208 = vmatprep.subr.bf16.mxu0 0
    %209 = vmatpush1.bf16.msra.mxu0 %v186
    %210 = vmatprep.subr.bf16.mxu0 0
    %211 = vmatpush2.bf16.msra.mxu0 0
    %212 = vmatprep.subr.bf16.mxu0 0
    %213 = vmatpush2.bf16.msra.mxu0 0
    %214 = vmatprep.subr.bf16.mxu0 0
    %215 = vmatpush2.bf16.msra.mxu0 0
    %216 = vmatprep.subr.bf16.mxu0 0
    %217 = vmatpush2.bf16.msra.mxu0 0
    %218 = vmatprep.subr.bf16.mxu0 0
    %219 = vmatpush2.bf16.msra.mxu0 0
    %220 = vmatprep.subr.bf16.mxu0 0
    %221 = vmatpush2.bf16.msra.mxu0 0
    %222 = vmatprep.subr.bf16.mxu0 0
    %223 = vmatpush2.bf16.msra.mxu0 0
    %224 = vmatprep.subr.bf16.mxu0 0
    %225 = vmatpush2.bf16.msra.mxu0 0
    %226 = vmatprep.mubr.bf16.mxu0 0
    %227 = vmatmul.mubr.bf16.gmra.mxu0 %v192
    %v228 = vpop.f32.mrf.mxu0
    %v229 = vadd.f32 %v176, %v228
    %v230 = vpop.f32.mrf.mxu0
    %v231 = vpop.f32.mrf.mxu0
    %v232 = vpop.f32.mrf.mxu0
    %233 = vdwg.mxu0
    %v234 = vpack.c.bf16 %v165, %v165
    %v235 = vld [vmem:[#allocation13] sm:$0xf]
    %v236 = vld [vmem:[#allocation13 + $0x4] sm:$0xf]
    %v237 = vld [vmem:[#allocation13 + $0x8] sm:$0xf]
    %v238 = vld [vmem:[#allocation13 + $0xc] sm:$0xf]
    %v239 = vld [vmem:[%s9] sm:$0x1]
    %v241 = vlaneseq
    %v242 = vshrl.u32 %v241, 7
    %v243 = vsub.s32 0, %v242
    %v244 = vrot.slane %v239, %v243
    %v250 = vunpack.c.l.b16 %v235
    %v251 = vunpack.c.l.b16 %v236
    %v252 = vunpack.c.l.b16 %v237
    %v253 = vunpack.c.l.b16 %v238
    %v254 = vpack.c.b16 %v251, %v250
    %v255 = vpack.c.b16 %v253, %v252
    %v259 = vsel %vm190, %v234, 0
    %261 = vmatprep.subr.bf16.mxu0 0
    %262 = vmatpush1.bf16.msra.mxu0 0
    %263 = vmatprep.subr.bf16.mxu0 0
    %264 = vmatpush1.bf16.msra.mxu0 0
    %265 = vmatprep.subr.bf16.mxu0 0
    %266 = vmatpush1.bf16.msra.mxu0 0
    %267 = vmatprep.subr.bf16.mxu0 0
    %268 = vmatpush1.bf16.msra.mxu0 0
    %269 = vmatprep.subr.bf16.mxu0 0
    %270 = vmatpush1.bf16.msra.mxu0 0
    %271 = vmatprep.subr.bf16.mxu0 0
    %272 = vmatpush1.bf16.msra.mxu0 0
    %273 = vmatprep.subr.bf16.mxu0 0
    %274 = vmatpush1.bf16.msra.mxu0 %v255
    %275 = vmatprep.subr.bf16.mxu0 0
    %276 = vmatpush1.bf16.msra.mxu0 %v254
    %277 = vmatprep.subr.bf16.mxu0 0
    %278 = vmatpush2.bf16.msra.mxu0 0
    %279 = vmatprep.subr.bf16.mxu0 0
    %280 = vmatpush2.bf16.msra.mxu0 0
    %281 = vmatprep.subr.bf16.mxu0 0
    %282 = vmatpush2.bf16.msra.mxu0 0
    %283 = vmatprep.subr.bf16.mxu0 0
    %284 = vmatpush2.bf16.msra.mxu0 0
    %285 = vmatprep.subr.bf16.mxu0 0
    %286 = vmatpush2.bf16.msra.mxu0 0
    %287 = vmatprep.subr.bf16.mxu0 0
    %288 = vmatpush2.bf16.msra.mxu0 0
    %289 = vmatprep.subr.bf16.mxu0 0
    %290 = vmatpush2.bf16.msra.mxu0 0
    %291 = vmatprep.subr.bf16.mxu0 0
    %292 = vmatpush2.bf16.msra.mxu0 0
    %293 = vmatprep.mubr.bf16.mxu0 0
    %294 = vmatmul.mubr.bf16.gmra.mxu0 %v259
    %v295 = vpop.f32.mrf.mxu0
    %v296 = vadd.f32 %v244, %v295
    %v297 = vpop.f32.mrf.mxu0
    %v298 = vpop.f32.mrf.mxu0
    %v299 = vpop.f32.mrf.mxu0
    %300 = vdwg.mxu0
    %v301 = vld [vmem:[%s3] sm:$0xf]
    %v302 = vunpack.c.l.bf16 %v301
    %v303 = vld [vmem:[#allocation8] sm:$0xf]
    %v304 = vunpack.c.l.bf16 %v303
    %v305 = vmul.f32 %v302, %v296
    %v306 = vsel %vm190, %v305, 0.0
    %307 = vadd.xlane.f32.xlu0 %v306
    %v308 = vpop.xlane.xlu0 %307
    %v309 = vmul.f32 %v308, 0.17677669
    %v310 = vmul.f32 %v304, %v229
    %v311 = vsel %vm190, %v310, 0.0
    %312 = vadd.xlane.f32.xlu0 %v311
    %v313 = vpop.xlane.xlu0 %312
    %v314 = vmul.f32 %v313, 0.17677669
    %316 = vrot.lane.b32.xlu0 %v296, 32
    %v317 = vpop.permute.xlu0 %316
    %v319 = vmul.f32 %v302, %v317
    %321 = vrot.lane.b32.xlu0 %v319, 96
    %v322 = vpop.permute.xlu0 %321
    %v324 = vsel %vm190, %v322, 0.0
    %325 = vadd.xlane.f32.xlu0 %v324
    %v326 = vpop.xlane.xlu0 %325
    %v327 = vmul.f32 %v326, 0.17677669
    %329 = vrot.lane.b32.xlu0 %v229, 32
    %v330 = vpop.permute.xlu0 %329
    %v332 = vmul.f32 %v304, %v330
    %334 = vrot.lane.b32.xlu0 %v332, 96
    %v335 = vpop.permute.xlu0 %334
    %v337 = vsel %vm190, %v335, 0.0
    %338 = vadd.xlane.f32.xlu0 %v337
    %v339 = vpop.xlane.xlu0 %338
    %v340 = vmul.f32 %v339, 0.17677669
    %341 = vrot.lane.b32.xlu0 %v296, 64
    %v342 = vpop.permute.xlu0 %341
    %v344 = vmul.f32 %v302, %v342
    %346 = vrot.lane.b32.xlu0 %v344, 64
    %v347 = vpop.permute.xlu0 %346
    %v349 = vsel %vm190, %v347, 0.0
    %350 = vadd.xlane.f32.xlu0 %v349
    %v351 = vpop.xlane.xlu0 %350
    %v352 = vmul.f32 %v351, 0.17677669
    %353 = vrot.lane.b32.xlu0 %v229, 64
    %v354 = vpop.permute.xlu0 %353
    %v356 = vmul.f32 %v304, %v354
    %358 = vrot.lane.b32.xlu0 %v356, 64
    %v359 = vpop.permute.xlu0 %358
    %v361 = vsel %vm190, %v359, 0.0
    %362 = vadd.xlane.f32.xlu0 %v361
    %v363 = vpop.xlane.xlu0 %362
    %v364 = vmul.f32 %v363, 0.17677669
    %365 = vrot.lane.b32.xlu0 %v296, 96
    %v366 = vpop.permute.xlu0 %365
    %v368 = vmul.f32 %v302, %v366
    %370 = vrot.lane.b32.xlu0 %v368, 32
    %v371 = vpop.permute.xlu0 %370
    %v373 = vsel %vm190, %v371, 0.0
    %374 = vadd.xlane.f32.xlu0 %v373
    %v375 = vpop.xlane.xlu0 %374
    %v376 = vmul.f32 %v375, 0.17677669
    %377 = vrot.lane.b32.xlu0 %v229, 96
    %v378 = vpop.permute.xlu0 %377
    %v380 = vmul.f32 %v304, %v378
    %382 = vrot.lane.b32.xlu0 %v380, 32
    %v383 = vpop.permute.xlu0 %382
    %v385 = vsel %vm190, %v383, 0.0
    %386 = vadd.xlane.f32.xlu0 %v385
    %v387 = vpop.xlane.xlu0 %386
    %v388 = vmul.f32 %v387, 0.17677669
    %v389 = vmax.f32 %v309, %v327
    %v390 = vmax.f32 %v389, %v352
    %v391 = vmax.f32 %v390, %v376
    %v392 = vsub.f32 %v309, %v391
    %v393 = vmul.f32 %v392, 1.442695
    %v394 = vpow.pop %v393
    %v395 = vsub.f32 %v327, %v391
    %v396 = vmul.f32 %v395, 1.442695
    %v397 = vpow.pop %v396
    %v398 = vsub.f32 %v352, %v391
    %v399 = vmul.f32 %v398, 1.442695
    %v400 = vpow.pop %v399
    %v401 = vsub.f32 %v376, %v391
    %v402 = vmul.f32 %v401, 1.442695
    %v403 = vpow.pop %v402
    %v404 = vadd.f32 %v394, %v397
    %v405 = vadd.f32 %v404, %v400
    %v406 = vadd.f32 %v405, %v403
    %v407 = vrcp.pop %v406
    %v408 = vmul.f32 1.0, %v407
    %v409 = vmul.f32 %v394, %v408
    %v410 = vmul.f32 %v397, %v408
    %v411 = vmul.f32 %v400, %v408
    %v412 = vmul.f32 %v403, %v408
    %v413 = vmax.f32 %v314, %v340
    %v414 = vmax.f32 %v413, %v364
    %v415 = vmax.f32 %v414, %v388
    %v416 = vsub.f32 %v314, %v415
    %v417 = vmul.f32 %v416, 1.442695
    %v418 = vpow.pop %v417
    %v419 = vsub.f32 %v340, %v415
    %v420 = vmul.f32 %v419, 1.442695
    %v421 = vpow.pop %v420
    %v422 = vsub.f32 %v364, %v415
    %v423 = vmul.f32 %v422, 1.442695
    %v424 = vpow.pop %v423
    %v425 = vsub.f32 %v388, %v415
    %v426 = vmul.f32 %v425, 1.442695
    %v427 = vpow.pop %v426
    %v428 = vadd.f32 %v418, %v421
    %v429 = vadd.f32 %v428, %v424
    %v430 = vadd.f32 %v429, %v427
    %v431 = vrcp.pop %v430
    %v432 = vmul.f32 1.0, %v431
    %v433 = vmul.f32 %v418, %v432
    %v434 = vmul.f32 %v421, %v432
    %v435 = vmul.f32 %v424, %v432
    %v436 = vmul.f32 %v427, %v432
    %v437 = vld [vmem:[#allocation7] sm:$0xf]
    %v438 = vunpack.c.l.bf16 %v437
    %v439 = vmul.f32 %v409, %v438
    %v440 = vld [vmem:[%s5] sm:$0xf]
    %v441 = vunpack.c.l.bf16 %v440
    %v442 = vmul.f32 %v433, %v441
    %v443 = vmul.f32 %v410, %v438
    %445 = vrot.lane.b32.xlu0 %v443, 96
    %v446 = vpop.permute.xlu0 %445
    %v448 = vadd.f32 %v439, %v446
    %v449 = vmul.f32 %v434, %v441
    %451 = vrot.lane.b32.xlu0 %v449, 96
    %v452 = vpop.permute.xlu0 %451
    %v454 = vadd.f32 %v442, %v452
    %v455 = vmul.f32 %v411, %v438
    %457 = vrot.lane.b32.xlu0 %v455, 64
    %v458 = vpop.permute.xlu0 %457
    %v460 = vadd.f32 %v448, %v458
    %v461 = vmul.f32 %v435, %v441
    %463 = vrot.lane.b32.xlu0 %v461, 64
    %v464 = vpop.permute.xlu0 %463
    %v466 = vadd.f32 %v454, %v464
    %v467 = vmul.f32 %v412, %v438
    %469 = vrot.lane.b32.xlu0 %v467, 32
    %v470 = vpop.permute.xlu0 %469
    %v472 = vadd.f32 %v460, %v470
    %v473 = vmul.f32 %v436, %v441
    %475 = vrot.lane.b32.xlu0 %v473, 32
    %v476 = vpop.permute.xlu0 %475
    %v478 = vadd.f32 %v466, %v476
    %v479 = vxor.u32 %v229, 2147483648
    %v480 = vmul.f32 %v479, 1.442695
    %v481 = vpow.pop %v480
    %v482 = vadd.f32 %v481, 1.0
    %v483 = vrcp.pop %v482
    %v484 = vmul.f32 1.0, %v483
    %v485 = vxor.u32 %v296, 2147483648
    %v486 = vmul.f32 %v485, 1.442695
    %v487 = vpow.pop %v486
    %v488 = vadd.f32 %v487, 1.0
    %v489 = vrcp.pop %v488
    %v490 = vmul.f32 1.0, %v489
    %v491 = vsub.f32 %v164, %v472
    %v492 = vmul.f32 %v484, %v491
    %v493 = vadd.f32 %v472, %v492
    %v494 = vsub.f32 %v165, %v478
    %v495 = vmul.f32 %v490, %v494
    %v496 = vadd.f32 %v478, %v495
    %v497 = vpack.c.bf16 %v493, %v493
    %v498 = vld [vmem:[#allocation14] sm:$0xff]
    %v499 = vld [vmem:[#allocation14 + $0x8] sm:$0xf]
    %v500 = vld [vmem:[#allocation14 + $0xc] sm:$0xff]
    %v501 = vld [vmem:[#allocation14 + $0x14] sm:$0xf]
    %v502 = vld [vmem:[#allocation14 + $0x18] sm:$0xff]
    %v503 = vld [vmem:[#allocation14 + $0x20] sm:$0xf]
    %v504 = vld [vmem:[#allocation14 + $0x24] sm:$0xff]
    %v505 = vld [vmem:[#allocation14 + $0x2c] sm:$0xf]
    %v506 = vld [vmem:[%s11] sm:$0x7]
    %v508 = vlaneseq
    %v509 = vshrl.u32 %v508, 7
    %v510 = vsub.s32 0, %v509
    %v511 = vrot.slane %v506, %v510
    %v512 = vlaneseq
    %v513 = vshrl.u32 %v512, 7
    %v514 = vsub.s32 1, %v513
    %v515 = vrot.slane %v506, %v514
    %v516 = vlaneseq
    %v517 = vshrl.u32 %v516, 7
    %v518 = vsub.s32 2, %v517
    %v519 = vrot.slane %v506, %v518
    %v531 = vunpack.c.l.b16 %v498
    %v532 = vunpack.c.h.b16 %v498
    %v533 = vunpack.c.l.b16 %v499
    %v534 = vunpack.c.l.b16 %v500
    %v535 = vunpack.c.h.b16 %v500
    %v536 = vunpack.c.l.b16 %v501
    %v537 = vunpack.c.l.b16 %v502
    %v538 = vunpack.c.h.b16 %v502
    %v539 = vunpack.c.l.b16 %v503
    %v540 = vunpack.c.l.b16 %v504
    %v541 = vunpack.c.h.b16 %v504
    %v542 = vunpack.c.l.b16 %v505
    %v543 = vpack.c.b16 %v534, %v531
    %v544 = vpack.c.b16 %v535, %v532
    %v545 = vpack.c.b16 %v536, %v533
    %v546 = vpack.c.b16 %v540, %v537
    %v547 = vpack.c.b16 %v541, %v538
    %v548 = vpack.c.b16 %v542, %v539
    %v556 = vsel %vm190, %v497, 0
    %558 = vmatprep.subr.bf16.mxu0 0
    %559 = vmatpush1.bf16.msra.mxu0 0
    %560 = vmatprep.subr.bf16.mxu0 0
    %561 = vmatpush1.bf16.msra.mxu0 0
    %562 = vmatprep.subr.bf16.mxu0 0
    %563 = vmatpush1.bf16.msra.mxu0 0
    %564 = vmatprep.subr.bf16.mxu0 0
    %565 = vmatpush1.bf16.msra.mxu0 0
    %566 = vmatprep.subr.bf16.mxu0 0
    %567 = vmatpush1.bf16.msra.mxu0 0
    %568 = vmatprep.subr.bf16.mxu0 0
    %569 = vmatpush1.bf16.msra.mxu0 0
    %570 = vmatprep.subr.bf16.mxu0 %v547
    %571 = vmatpush1.bf16.msra.mxu0 %v546
    %572 = vmatprep.subr.bf16.mxu0 %v544
    %573 = vmatpush1.bf16.msra.mxu0 %v543
    %574 = vmatprep.subr.bf16.mxu0 0
    %575 = vmatpush2.bf16.msra.mxu0 0
    %576 = vmatprep.subr.bf16.mxu0 0
    %577 = vmatpush2.bf16.msra.mxu0 0
    %578 = vmatprep.subr.bf16.mxu0 0
    %579 = vmatpush2.bf16.msra.mxu0 0
    %580 = vmatprep.subr.bf16.mxu0 0
    %581 = vmatpush2.bf16.msra.mxu0 0
    %582 = vmatprep.subr.bf16.mxu0 0
    %583 = vmatpush2.bf16.msra.mxu0 0
    %584 = vmatprep.subr.bf16.mxu0 0
    %585 = vmatpush2.bf16.msra.mxu0 0
    %586 = vmatprep.subr.bf16.mxu0 0
    %587 = vmatpush2.bf16.msra.mxu0 0
    %588 = vmatprep.subr.bf16.mxu0 0
    %589 = vmatpush2.bf16.msra.mxu0 0
    %590 = vmatprep.mubr.bf16.mxu0 0
    %591 = vmatmul.mubr.bf16.gmra.mxu0 %v556
    %v592 = vpop.f32.mrf.mxu0
    %v593 = vadd.f32 %v511, %v592
    %v594 = vpop.f32.mrf.mxu0
    %v595 = vadd.f32 %v515, %v594
    %v596 = vpop.f32.mrf.mxu0
    %v597 = vpop.f32.mrf.mxu0
    %598 = vdwg.mxu0
    %599 = vmatprep.subr.bf16.mxu0 0
    %600 = vmatpush1.bf16.msra.mxu0 0
    %601 = vmatprep.subr.bf16.mxu0 0
    %602 = vmatpush1.bf16.msra.mxu0 0
    %603 = vmatprep.subr.bf16.mxu0 0
    %604 = vmatpush1.bf16.msra.mxu0 0
    %605 = vmatprep.subr.bf16.mxu0 0
    %606 = vmatpush1.bf16.msra.mxu0 0
    %607 = vmatprep.subr.bf16.mxu0 0
    %608 = vmatpush1.bf16.msra.mxu0 0
    %609 = vmatprep.subr.bf16.mxu0 0
    %610 = vmatpush1.bf16.msra.mxu0 0
    %611 = vmatprep.subr.bf16.mxu0 0
    %612 = vmatpush1.bf16.msra.mxu0 %v548
    %613 = vmatprep.subr.bf16.mxu0 0
    %614 = vmatpush1.bf16.msra.mxu0 %v545
    %615 = vmatprep.subr.bf16.mxu0 0
    %616 = vmatpush2.bf16.msra.mxu0 0
    %617 = vmatprep.subr.bf16.mxu0 0
    %618 = vmatpush2.bf16.msra.mxu0 0
    %619 = vmatprep.subr.bf16.mxu0 0
    %620 = vmatpush2.bf16.msra.mxu0 0
    %621 = vmatprep.subr.bf16.mxu0 0
    %622 = vmatpush2.bf16.msra.mxu0 0
    %623 = vmatprep.subr.bf16.mxu0 0
    %624 = vmatpush2.bf16.msra.mxu0 0
    %625 = vmatprep.subr.bf16.mxu0 0
    %626 = vmatpush2.bf16.msra.mxu0 0
    %627 = vmatprep.subr.bf16.mxu0 0
    %628 = vmatpush2.bf16.msra.mxu0 0
    %629 = vmatprep.subr.bf16.mxu0 0
    %630 = vmatpush2.bf16.msra.mxu0 0
    %631 = vmatprep.mubr.bf16.mxu0 0
    %632 = vmatmul.mubr.bf16.gmra.mxu0 %v556
    %v633 = vpop.f32.mrf.mxu0
    %v634 = vadd.f32 %v519, %v633
    %v635 = vpop.f32.mrf.mxu0
    %v636 = vpop.f32.mrf.mxu0
    %v637 = vpop.f32.mrf.mxu0
    %638 = vdwg.mxu0
    %v639 = vpack.c.bf16 %v496, %v496
    %v640 = vld [vmem:[#allocation16] sm:$0xff]
    %v641 = vld [vmem:[#allocation16 + $0x8] sm:$0xf]
    %v642 = vld [vmem:[#allocation16 + $0xc] sm:$0xff]
    %v643 = vld [vmem:[#allocation16 + $0x14] sm:$0xf]
    %v644 = vld [vmem:[#allocation16 + $0x18] sm:$0xff]
    %v645 = vld [vmem:[#allocation16 + $0x20] sm:$0xf]
    %v646 = vld [vmem:[#allocation16 + $0x24] sm:$0xff]
    %v647 = vld [vmem:[#allocation16 + $0x2c] sm:$0xf]
    %v648 = vld [vmem:[%s13] sm:$0x7]
    %v650 = vlaneseq
    %v651 = vshrl.u32 %v650, 7
    %v652 = vsub.s32 0, %v651
    %v653 = vrot.slane %v648, %v652
    %v654 = vlaneseq
    %v655 = vshrl.u32 %v654, 7
    %v656 = vsub.s32 1, %v655
    %v657 = vrot.slane %v648, %v656
    %v658 = vlaneseq
    %v659 = vshrl.u32 %v658, 7
    %v660 = vsub.s32 2, %v659
    %v661 = vrot.slane %v648, %v660
    %v673 = vunpack.c.l.b16 %v640
    %v674 = vunpack.c.h.b16 %v640
    %v675 = vunpack.c.l.b16 %v641
    %v676 = vunpack.c.l.b16 %v642
    %v677 = vunpack.c.h.b16 %v642
    %v678 = vunpack.c.l.b16 %v643
    %v679 = vunpack.c.l.b16 %v644
    %v680 = vunpack.c.h.b16 %v644
    %v681 = vunpack.c.l.b16 %v645
    %v682 = vunpack.c.l.b16 %v646
    %v683 = vunpack.c.h.b16 %v646
    %v684 = vunpack.c.l.b16 %v647
    %v685 = vpack.c.b16 %v676, %v673
    %v686 = vpack.c.b16 %v677, %v674
    %v687 = vpack.c.b16 %v678, %v675
    %v688 = vpack.c.b16 %v682, %v679
    %v689 = vpack.c.b16 %v683, %v680
    %v690 = vpack.c.b16 %v684, %v681
    %v698 = vsel %vm190, %v639, 0
    %700 = vmatprep.subr.bf16.mxu0 0
    %701 = vmatpush1.bf16.msra.mxu0 0
    %702 = vmatprep.subr.bf16.mxu0 0
    %703 = vmatpush1.bf16.msra.mxu0 0
    %704 = vmatprep.subr.bf16.mxu0 0
    %705 = vmatpush1.bf16.msra.mxu0 0
    %706 = vmatprep.subr.bf16.mxu0 0
    %707 = vmatpush1.bf16.msra.mxu0 0
    %708 = vmatprep.subr.bf16.mxu0 0
    %709 = vmatpush1.bf16.msra.mxu0 0
    %710 = vmatprep.subr.bf16.mxu0 0
    %711 = vmatpush1.bf16.msra.mxu0 0
    %712 = vmatprep.subr.bf16.mxu0 %v689
    %713 = vmatpush1.bf16.msra.mxu0 %v688
    %714 = vmatprep.subr.bf16.mxu0 %v686
    %715 = vmatpush1.bf16.msra.mxu0 %v685
    %716 = vmatprep.subr.bf16.mxu0 0
    %717 = vmatpush2.bf16.msra.mxu0 0
    %718 = vmatprep.subr.bf16.mxu0 0
    %719 = vmatpush2.bf16.msra.mxu0 0
    %720 = vmatprep.subr.bf16.mxu0 0
    %721 = vmatpush2.bf16.msra.mxu0 0
    %722 = vmatprep.subr.bf16.mxu0 0
    %723 = vmatpush2.bf16.msra.mxu0 0
    %724 = vmatprep.subr.bf16.mxu0 0
    %725 = vmatpush2.bf16.msra.mxu0 0
    %726 = vmatprep.subr.bf16.mxu0 0
    %727 = vmatpush2.bf16.msra.mxu0 0
    %728 = vmatprep.subr.bf16.mxu0 0
    %729 = vmatpush2.bf16.msra.mxu0 0
    %730 = vmatprep.subr.bf16.mxu0 0
    %731 = vmatpush2.bf16.msra.mxu0 0
    %732 = vmatprep.mubr.bf16.mxu0 0
    %733 = vmatmul.mubr.bf16.gmra.mxu0 %v698
    %v734 = vpop.f32.mrf.mxu0
    %v735 = vadd.f32 %v653, %v734
    %v736 = vpop.f32.mrf.mxu0
    %v737 = vadd.f32 %v657, %v736
    %v738 = vpop.f32.mrf.mxu0
    %v739 = vpop.f32.mrf.mxu0
    %740 = vdwg.mxu0
    %741 = vmatprep.subr.bf16.mxu0 0
    %742 = vmatpush1.bf16.msra.mxu0 0
    %743 = vmatprep.subr.bf16.mxu0 0
    %744 = vmatpush1.bf16.msra.mxu0 0
    %745 = vmatprep.subr.bf16.mxu0 0
    %746 = vmatpush1.bf16.msra.mxu0 0
    %747 = vmatprep.subr.bf16.mxu0 0
    %748 = vmatpush1.bf16.msra.mxu0 0
    %749 = vmatprep.subr.bf16.mxu0 0
    %750 = vmatpush1.bf16.msra.mxu0 0
    %751 = vmatprep.subr.bf16.mxu0 0
    %752 = vmatpush1.bf16.msra.mxu0 0
    %753 = vmatprep.subr.bf16.mxu0 0
    %754 = vmatpush1.bf16.msra.mxu0 %v690
    %755 = vmatprep.subr.bf16.mxu0 0
    %756 = vmatpush1.bf16.msra.mxu0 %v687
    %757 = vmatprep.subr.bf16.mxu0 0
    %758 = vmatpush2.bf16.msra.mxu0 0
    %759 = vmatprep.subr.bf16.mxu0 0
    %760 = vmatpush2.bf16.msra.mxu0 0
    %761 = vmatprep.subr.bf16.mxu0 0
    %762 = vmatpush2.bf16.msra.mxu0 0
    %763 = vmatprep.subr.bf16.mxu0 0
    %764 = vmatpush2.bf16.msra.mxu0 0
    %765 = vmatprep.subr.bf16.mxu0 0
    %766 = vmatpush2.bf16.msra.mxu0 0
    %767 = vmatprep.subr.bf16.mxu0 0
    %768 = vmatpush2.bf16.msra.mxu0 0
    %769 = vmatprep.subr.bf16.mxu0 0
    %770 = vmatpush2.bf16.msra.mxu0 0
    %771 = vmatprep.subr.bf16.mxu0 0
    %772 = vmatpush2.bf16.msra.mxu0 0
    %773 = vmatprep.mubr.bf16.mxu0 0
    %774 = vmatmul.mubr.bf16.gmra.mxu0 %v698
    %v775 = vpop.f32.mrf.mxu0
    %v776 = vadd.f32 %v661, %v775
    %v777 = vpop.f32.mrf.mxu0
    %v778 = vpop.f32.mrf.mxu0
    %v779 = vpop.f32.mrf.mxu0
    %780 = vdwg.mxu0
    %v781 = vxor.u32 %v593, 2147483648
    %v782 = vmul.f32 %v781, 1.442695
    %v783 = vpow.pop %v782
    %v784 = vadd.f32 %v783, 1.0
    %v785 = vrcp.pop %v784
    %v786 = vmul.f32 1.0, %v785
    %v787 = vxor.u32 %v735, 2147483648
    %v788 = vmul.f32 %v787, 1.442695
    %v789 = vpow.pop %v788
    %v790 = vadd.f32 %v789, 1.0
    %v791 = vrcp.pop %v790
    %v792 = vmul.f32 1.0, %v791
    %v793 = vsub.f32 %v595, %v737
    %v794 = vmul.f32 %v786, %v793
    %v795 = vadd.f32 %v737, %v794
    %v796 = vsub.f32 %v776, %v634
    %v797 = vmul.f32 %v792, %v796
    %v798 = vadd.f32 %v634, %v797
    %799 = vst.msk [vmem:[#allocation17] sm:$0xff] %vm190, %v795
    %800 = vst.msk [vmem:[#allocation18] sm:$0xff] %vm190, %v798
    // Predicated region
    $region94: #{tpu_custom_call.1} parent=1 // pred_check
      _
    $region95: #{tpu_custom_call.1} parent=1 // pred_check_branch
      %802 = sbr.rel (0) target = $region97
    $region96: #{tpu_custom_call.1} parent=1 // pred_region
      %s804 = ssub.s32 128, 128
      %805 = vsyncadd [#allocation4], %s804
      %s807 = sshll.u32 [#allocation17], 4
      %s808 = int_to_ptr.vmem [resolvable:$true] %s807
      %810 = dma.vmem_to_hbm [thread:$0]  %s808, 128, %s14, [#allocation4]
    $region97: #{tpu_custom_call.1} parent=1 // pred_fallthru
      _
    // Predicated region
    $region98: #{tpu_custom_call.1} parent=1 // pred_check
      _
    $region99: #{tpu_custom_call.1} parent=1 // pred_check_branch
      %812 = sbr.rel (0) target = $region101
    $region100: #{tpu_custom_call.1} parent=1 // pred_region
      %s814 = ssub.s32 128, 128
      %815 = vsyncadd [#allocation19], %s814
      %s817 = sshll.u32 [#allocation18], 4
      %s818 = int_to_ptr.vmem [resolvable:$true] %s817
      %820 = dma.vmem_to_hbm [thread:$0]  %s818, 128, %s15, [#allocation19]
    $region101: #{tpu_custom_call.1} parent=1 // pred_fallthru
      _
    // Predicated region
    $region102: #{tpu_custom_call.1} parent=1 // pred_check
      _
    $region103: #{tpu_custom_call.1} parent=1 // pred_check_branch
      %822 = sbr.rel (0) target = $region105
    $region104: #{tpu_custom_call.1} parent=1 // pred_region
      %823 = dma.done [#allocation4], 128
    $region105: #{tpu_custom_call.1} parent=1 // pred_fallthru
      _
    // Predicated region
    $region106: #{tpu_custom_call.1} parent=1 // pred_check
      _
    $region107: #{tpu_custom_call.1} parent=1 // pred_check_branch
      %825 = sbr.rel (0) target = $region109
    $region108: #{tpu_custom_call.1} parent=1 // pred_region
      %826 = dma.done [#allocation19], 128
    $region109: #{tpu_custom_call.1} parent=1 // pred_fallthru
      _
    %827 = vsyncpa [#allocation3], 1
    %828 = vsyncpa [#allocation6], 1
    %829 = vsyncpa [#allocation9], 1
    %830 = vsyncpa [#allocation12], 1
    %831 = vsyncpa [#allocation15], 1
    %832 = vsyncpa [#allocation4], 1
    %833 = vsyncpa [#allocation19], 1

</llo_original>
